<compile_context>
chip_gen: v7x
topology: tpu7x:2x2x1
jax: 0.10.0
libtpu: 0.0.40
codegen_flags: <defaults>
</compile_context>

<pallas_src>
import functools
import math

import jax
import jax.numpy as jnp
from jax.experimental import pallas as pl
from jax.experimental.pallas import tpu as pltpu

_ROW_TILE = 2048          # adjacency row / reduction tile once N exceeds 2*_ROW_TILE
_EDGE_TILE = 512          # loss-kernel edge tile


def _round_up(x, m):
    return ((x + m - 1) // m) * m


# ---------------------------------------------------------------------------
# Kernels
# ---------------------------------------------------------------------------
def _fused_sage_kernel(ap_ref, an_ref, sp_ref, sn_ref, xk_ref, xi_ref,
                       w1_ref, w2_ref, w3_ref, b_ref, o_ref, accp_ref, accn_ref):
    """One signed-SAGE layer with the positive + negative aggregators fused.

    Grid = (row tiles, K reduction tiles).  Per K step (int8 counts -> bf16 MXU):
        accp += C_pos[i, k] @ X[k]      (f32 accumulation)
        accn += C_neg[i, k] @ X[k]
    At the last K step the per-row 1/deg scale turns counts into scatter_mean and the
    (pre-combined, bf16) weights are applied:
        h   = (sp*accp) @ W1 + (sn*accn) @ W2 + X[i] @ W3 + b    # (TM, 2*H_out)
        out = tanh([l2norm(h[:, :H]) | l2norm(h[:, H:])])        # lane-dense [h_pos|h_neg]
    """
    k = pl.program_id(1)

    @pl.when(k == 0)
    def _():
        accp_ref[...] = jnp.zeros_like(accp_ref)
        accn_ref[...] = jnp.zeros_like(accn_ref)

    xk = xk_ref[...]                                  # already bf16
    ap = ap_ref[...].astype(jnp.bfloat16)             # int8 counts -> bf16 (exact)
    an = an_ref[...].astype(jnp.bfloat16)
    accp_ref[...] += jnp.dot(ap, xk, preferred_element_type=jnp.float32)
    accn_ref[...] += jnp.dot(an, xk, preferred_element_type=jnp.float32)

    @pl.when(k == pl.num_programs(1) - 1)
    def _():
        # per-row 1/deg applied once at finalize -> exact scatter_mean normalization
        accp = (accp_ref[...] * sp_ref[...]).astype(jnp.bfloat16)
        accn = (accn_ref[...] * sn_ref[...]).astype(jnp.bfloat16)
        h = (jnp.dot(accp, w1_ref[...], preferred_element_type=jnp.float32)
             + jnp.dot(accn, w2_ref[...], preferred_element_type=jnp.float32)
             + jnp.dot(xi_ref[...], w3_ref[...], preferred_element_type=jnp.float32)
             + b_ref[...])
        hout = o_ref.shape[1] // 2
        hp, hn = h[:, :hout], h[:, hout:]
        # F.normalize(p=2, eps=1e-12): x / max(||x||, 1e-12) == x * rsqrt(max(||x||^2, 1e-24))
        inv_p = jax.lax.rsqrt(
            jnp.maximum(jnp.sum(hp * hp, axis=-1, keepdims=True), 1e-24))
        inv_n = jax.lax.rsqrt(
            jnp.maximum(jnp.sum(hn * hn, axis=-1, keepdims=True), 1e-24))
        o_ref[...] = jnp.tanh(
            jnp.concatenate([hp * inv_p, hn * inv_n], axis=-1)).astype(o_ref.dtype)


def _fused_loss_kernel(pzi_ref, pzj_ref, pzk_ref, nzi_ref, nzj_ref, nzk_ref,
                       t0_ref, t1_ref, t2_ref, t3_ref, t4_ref, t5_ref,
                       wra_ref, wrb_ref, wfc_ref,
                       loss_ref, p0_ref, p1_ref, p2_ref, p3_ref, p4_ref, p5_ref,
                       hp_ref, hn_ref, nl_ref, *, lamb, n_pos, n_neg, n_rows):
    """Hinge embedding losses + regression head + NLL, grid-tiled over edge tiles.

    The (M, 4H) feature matrix is never materialized: each of the six feature blocks is
    computed as z_a @ Wr_top + z_b @ Wr_bot directly from the gathered edge rows.
    """
    e = pl.program_id(0)

    @pl.when(e == 0)
    def _():
        hp_ref[...] = jnp.zeros_like(hp_ref)
        hn_ref[...] = jnp.zeros_like(hn_ref)
        nl_ref[...] = jnp.zeros_like(nl_ref)

    te = pzi_ref.shape[0]
    rows = e * te + jax.lax.broadcasted_iota(jnp.int32, (te, 1), 0)
    pmask = rows < n_pos
    nmask = rows < n_neg

    pzi, pzj, pzk = pzi_ref[...], pzj_ref[...], pzk_ref[...]
    nzi, nzj, nzk = nzi_ref[...], nzj_ref[...], nzk_ref[...]

    # --- positive / negative embedding (distance hinge) losses (sums) -------
    d_pij = jnp.sum((pzi - pzj) ** 2, axis=-1, keepdims=True)
    d_pik = jnp.sum((pzi - pzk) ** 2, axis=-1, keepdims=True)
    hp_ref[...] += jnp.sum(jnp.where(pmask, jnp.maximum(d_pij - d_pik, 0.0), 0.0))
    d_nij = jnp.sum((nzi - nzj) ** 2, axis=-1, keepdims=True)
    d_nik = jnp.sum((nzi - nzk) ** 2, axis=-1, keepdims=True)
    hn_ref[...] += jnp.sum(jnp.where(nmask, jnp.maximum(d_nik - d_nij, 0.0), 0.0))

    # --- regression head built in-kernel ------------------------------------
    wra, wrb, wfc = wra_ref[...], wrb_ref[...], wfc_ref[...]

    def head(za, zb, tgt, mask, pred_ref):
        p = (jnp.dot(za, wra, preferred_element_type=jnp.float32)
             + jnp.dot(zb, wrb, preferred_element_type=jnp.float32))
        logits = jnp.dot(p, wfc, preferred_element_type=jnp.float32)
        mx = jnp.max(logits, axis=-1, keepdims=True)
        lse = mx + jnp.log(jnp.sum(jnp.exp(logits - mx), axis=-1, keepdims=True))
        logsm = logits - lse
        pred_ref[...] = logsm
        classes = jax.lax.broadcasted_iota(jnp.int32, logsm.shape, 1)
        onehot = (classes == tgt).astype(jnp.float32)
        nll = -jnp.sum(onehot * logsm, axis=-1, keepdims=True)
        return jnp.sum(jnp.where(mask, nll, 0.0))

    nll_sum = (head(pzi, pzj, t0_ref[...], pmask, p0_ref)
               + head(nzi, nzj, t1_ref[...], nmask, p1_ref)
               + head(nzi, nzk, t2_ref[...], nmask, p2_ref)
               + head(nzj, nzk, t3_ref[...], nmask, p3_ref)
               + head(pzi, pzk, t4_ref[...], pmask, p4_ref)
               + head(pzj, pzk, t5_ref[...], pmask, p5_ref))
    nl_ref[...] += nll_sum

    @pl.when(e == pl.num_programs(0) - 1)
    def _():
        loss_ref[...] = (nl_ref[...] * (1.0 / n_rows)
                         + lamb * (hp_ref[...] * (1.0 / n_pos)
                                   + hn_ref[...] * (1.0 / n_neg)))


# ---------------------------------------------------------------------------
# Tiling helpers
# ---------------------------------------------------------------------------
def _sage_tiles(n):
    """(padded N, row tile tm, reduction tile tk).

    Always >= 2 row tiles so the "parallel" row axis can split across v7x's two
    TensorCores; tiles capped at _ROW_TILE; all tile dims are multiples of 128 so the
    int8 / bf16 blocks stay layout-aligned.
    """
    if n <= 2 * _ROW_TILE:
        tm = max(_round_up((n + 1) // 2, 128), 128)
        n_pad = 2 * tm
        tk = n_pad if n_pad <= _ROW_TILE else tm
    else:
        tm = tk = _ROW_TILE
        n_pad = _round_up(n, _ROW_TILE)
    return n_pad, tm, tk


def _edge_tiles(e_max):
    """(padded edge count, edge tile)."""
    if e_max <= _EDGE_TILE:
        e_pad = max(_round_up(e_max, 8), 8)
        return e_pad, e_pad
    e_pad = _round_up(e_max, _EDGE_TILE)
    return e_pad, _EDGE_TILE


# ---------------------------------------------------------------------------
# Wrappers
# ---------------------------------------------------------------------------
def fused_sage_layer(cp, cn, sp, sn, x, w1, w2, w3, b, out_dtype=jnp.float32):
    """out[:, :H] = pos aggregator, out[:, H:] = neg aggregator (single pallas_call)."""
    n, f_in = x.shape
    h2 = w1.shape[1]                      # = 2 * H_out (lane-dense combined output)
    n_pad, tm, tk = _sage_tiles(n)
    if n_pad != n:
        pad = n_pad - n
        cp = jnp.pad(cp, ((0, pad), (0, pad)))
        cn = jnp.pad(cn, ((0, pad), (0, pad)))
        sp = jnp.pad(sp, ((0, pad), (0, 0)))
        sn = jnp.pad(sn, ((0, pad), (0, 0)))
        x = jnp.pad(x, ((0, pad), (0, 0)))
    x = x.astype(jnp.bfloat16)            # bf16 activations; accumulation stays f32

    out = pl.pallas_call(
        _fused_sage_kernel,
        out_shape=jax.ShapeDtypeStruct((n_pad, h2), out_dtype),
        grid_spec=pltpu.PrefetchScalarGridSpec(
            num_scalar_prefetch=0,
            grid=(n_pad // tm, n_pad // tk),
            in_specs=[
                pl.BlockSpec((tm, tk), lambda i, k: (i, k)),      # C_pos tile (int8)
                pl.BlockSpec((tm, tk), lambda i, k: (i, k)),      # C_neg tile (int8)
                pl.BlockSpec((tm, 1), lambda i, k: (i, 0)),       # 1/deg_pos (f32)
                pl.BlockSpec((tm, 1), lambda i, k: (i, 0)),       # 1/deg_neg (f32)
                pl.BlockSpec((tk, f_in), lambda i, k: (k, 0)),    # X (neighbour rows)
                pl.BlockSpec((tm, f_in), lambda i, k: (i, 0)),    # X (self rows)
                pl.BlockSpec((f_in, h2), lambda i, k: (0, 0)),    # W1 (on pos agg)
                pl.BlockSpec((f_in, h2), lambda i, k: (0, 0)),    # W2 (on neg agg)
                pl.BlockSpec((f_in, h2), lambda i, k: (0, 0)),    # W3 (on self X)
                pl.BlockSpec((1, h2), lambda i, k: (0, 0)),       # bias [bp | bn]
            ],
            out_specs=pl.BlockSpec((tm, h2), lambda i, k: (i, 0)),
            scratch_shapes=[pltpu.VMEM((tm, f_in), jnp.float32),
                            pltpu.VMEM((tm, f_in), jnp.float32)],
        ),
        compiler_params=pltpu.CompilerParams(
            dimension_semantics=("parallel", "arbitrary"),
            vmem_limit_bytes=48 * 1024 * 1024,   # fits v7x 64 MiB; int8 tiles ~23 MiB
        ),
    )(cp, cn, sp, sn, x, x, w1, w2, w3, b)
    return out if n_pad == n else out[:n]


def fused_loss(pz_i, pz_j, pz_k, nz_i, nz_j, nz_k, w_reg, w_fc, target, lamb):
    e_pos, two_h = pz_i.shape
    e_neg = nz_i.shape[0]
    m_rows = 3 * (e_pos + e_neg)
    e_pad, te = _edge_tiles(max(e_pos, e_neg))

    def pad_rows(a):
        return jnp.pad(a.astype(jnp.float32), ((0, e_pad - a.shape[0]), (0, 0)))

    pzs = [pad_rows(a) for a in (pz_i, pz_j, pz_k)]
    nzs = [pad_rows(a) for a in (nz_i, nz_j, nz_k)]

    # target slices in the original `features` row order:
    # (pos, neg, surr_neg_i, surr_neg_j, surr_pos_i, surr_pos_j)
    sizes = [e_pos, e_neg, e_neg, e_neg, e_pos, e_pos]
    offs = [0]
    for s in sizes[:-1]:
        offs.append(offs[-1] + s)
    tgt = target.astype(jnp.int32)
    tgts = [jnp.pad(tgt[o:o + s], (0, e_pad - s)).reshape(e_pad, 1)
            for o, s in zip(offs, sizes)]

    h = w_reg.shape[1]
    wra = w_reg[:two_h]                   # multiplies z_a (left half of features)
    wrb = w_reg[two_h:]                   # multiplies z_b (right half of features)

    kernel = functools.partial(_fused_loss_kernel, lamb=float(lamb),
                               n_pos=e_pos, n_neg=e_neg, n_rows=m_rows)
    edge_spec = pl.BlockSpec((te, two_h), lambda e: (e, 0))
    tgt_spec = pl.BlockSpec((te, 1), lambda e: (e, 0))
    pred_spec = pl.BlockSpec((te, 3), lambda e: (e, 0))

    def const(shape):
        return pl.BlockSpec(shape, lambda e: (0, 0))

    outs = pl.pallas_call(
        kernel,
        out_shape=(jax.ShapeDtypeStruct((1, 1), jnp.float32),)
        + tuple(jax.ShapeDtypeStruct((e_pad, 3), jnp.float32) for _ in range(6)),
        grid_spec=pltpu.PrefetchScalarGridSpec(
            num_scalar_prefetch=0,
            grid=(e_pad // te,),
            in_specs=[edge_spec] * 6 + [tgt_spec] * 6
                     + [const((two_h, h)), const((two_h, h)), const((h, 3))],
            out_specs=(const((1, 1)),) + (pred_spec,) * 6,
            scratch_shapes=[pltpu.VMEM((1, 1), jnp.float32)] * 3,
        ),
        compiler_params=pltpu.CompilerParams(dimension_semantics=("arbitrary",)),
    )(*pzs, *nzs, *tgts, wra, wrb, w_fc)
    loss, preds = outs[0], outs[1:]
    predictions_soft = jnp.concatenate(
        [p[:s] for p, s in zip(preds, sizes)], axis=0)
    return loss[0, 0], predictions_soft


# ---------------------------------------------------------------------------
# Weight re-packing so pos + neg aggregators share one kernel / one matmul set
# ---------------------------------------------------------------------------
def _combine_base_weights(wp, bp, wn, bn):
    # base aggregator: h = (A @ X) @ W[:F] + X @ W[F:] + b
    f = wp.shape[0] // 2
    hdim = wp.shape[1]
    z = jnp.zeros((f, hdim), jnp.float32)
    w1 = jnp.concatenate([wp[:f], z], axis=1)        # multiplies accp = A_pos @ X
    w2 = jnp.concatenate([z, wn[:f]], axis=1)        # multiplies accn = A_neg @ X
    w3 = jnp.concatenate([wp[f:], wn[f:]], axis=1)   # multiplies X (self features)
    b = jnp.concatenate([bp, bn], axis=1)
    return (w1.astype(jnp.bfloat16), w2.astype(jnp.bfloat16),
            w3.astype(jnp.bfloat16), b)


def _combine_deep_weights(wp, bp, wn, bn):
    # deep aggregator (pos call): cat(A_pos@h_pos, A_neg@h_neg, h_pos, h_neg) @ Wp
    # deep aggregator (neg call): cat(A_pos@h_neg, A_neg@h_pos, h_neg, h_pos) @ Wn
    # kernel computes h = accp @ W1 + accn @ W2 + Hc @ W3 + b with Hc = [h_pos | h_neg]
    h1 = wp.shape[0] // 4
    h2 = wp.shape[1]
    z = jnp.zeros((h1, h2), jnp.float32)
    w1 = jnp.concatenate([jnp.concatenate([wp[0:h1], z], axis=1),
                          jnp.concatenate([z, wn[0:h1]], axis=1)], axis=0)
    w2 = jnp.concatenate([jnp.concatenate([z, wn[h1:2 * h1]], axis=1),
                          jnp.concatenate([wp[h1:2 * h1], z], axis=1)], axis=0)
    w3 = jnp.concatenate([jnp.concatenate([wp[2 * h1:3 * h1], wn[3 * h1:4 * h1]], axis=1),
                          jnp.concatenate([wp[3 * h1:4 * h1], wn[2 * h1:3 * h1]], axis=1)],
                         axis=0)
    b = jnp.concatenate([bp, bn], axis=1)
    return (w1.astype(jnp.bfloat16), w2.astype(jnp.bfloat16),
            w3.astype(jnp.bfloat16), b)


# ---------------------------------------------------------------------------
# Graph / parameter glue (plain JAX)
# ---------------------------------------------------------------------------
def build_adj_counts(edges, n_nodes, add_self_loops):
    # scatter_mean(x[col], row) == diag(1/deg) @ (C @ x) with C[r,c] = edge count(r,c)
    row, col = edges[0], edges[1]
    w = (row != col).astype(jnp.float32)          # remove_self_loops
    cnt = jnp.zeros((n_nodes, n_nodes), jnp.float32).at[row, col].add(w)
    if add_self_loops:
        cnt = cnt + jnp.eye(n_nodes, dtype=jnp.float32)
    deg = jnp.sum(cnt, axis=1, keepdims=True)
    inv_deg = jnp.where(deg > 0, 1.0 / jnp.maximum(deg, 1.0), 0.0)
    # TODO(synk): int8 counts saturate past 127 parallel edges between one node pair.
    return cnt.astype(jnp.int8), inv_deg


def glorot_normal(key, shape):
    fan_in, fan_out = shape
    std = math.sqrt(2.0 / (fan_in + fan_out))
    return std * jax.random.normal(key, shape, jnp.float32)


def init_params(key, in_feat, neurons):
    n_deep = len(neurons) - 1
    ks = jax.random.split(key, 4 + 2 * n_deep)
    params = {
        "pos_base_w": glorot_normal(ks[0], (2 * in_feat, neurons[0])),
        "pos_base_b": jnp.zeros((1, neurons[0]), jnp.float32),
        "neg_base_w": glorot_normal(ks[1], (2 * in_feat, neurons[0])),
        "neg_base_b": jnp.zeros((1, neurons[0]), jnp.float32),
        "pos_deep": [],
        "neg_deep": [],
    }
    idx = 2
    for i in range(1, len(neurons)):
        params["pos_deep"].append(
            (glorot_normal(ks[idx], (4 * neurons[i - 1], neurons[i])),
             jnp.zeros((1, neurons[i]), jnp.float32)))
        idx += 1
        params["neg_deep"].append(
            (glorot_normal(ks[idx], (4 * neurons[i - 1], neurons[i])),
             jnp.zeros((1, neurons[i]), jnp.float32)))
        idx += 1
    params["regression_weights"] = glorot_normal(ks[idx], (4 * neurons[-1], neurons[-1]))
    params["fc_weights"] = glorot_normal(ks[idx + 1], (neurons[-1], 3))
    return params


def sgcn_forward(params, X, pos_edges, neg_edges, target, pos_surr, neg_surr, lamb=1.0):
    n = X.shape[0]
    n_layers = 1 + len(params["pos_deep"])

    cp_base, sp_base = build_adj_counts(pos_edges, n, add_self_loops=False)
    cn_base, sn_base = build_adj_counts(neg_edges, n, add_self_loops=False)
    cp_deep, sp_deep = build_adj_counts(pos_edges, n, add_self_loops=True)
    cn_deep, sn_deep = build_adj_counts(neg_edges, n, add_self_loops=True)

    # base layer (pos + neg base aggregators fused, output = [h_pos | h_neg])
    w1, w2, w3, b = _combine_base_weights(params["pos_base_w"], params["pos_base_b"],
                                          params["neg_base_w"], params["neg_base_b"])
    hc = fused_sage_layer(cp_base, cn_base, sp_base, sn_base, X, w1, w2, w3, b,
                          out_dtype=jnp.bfloat16 if n_layers > 1 else jnp.float32)

    # deep layers (pos + neg deep aggregators fused per layer)
    for i in range(1, n_layers):
        wp, bp = params["pos_deep"][i - 1]
        wn, bn = params["neg_deep"][i - 1]
        w1, w2, w3, b = _combine_deep_weights(wp, bp, wn, bn)
        out_dtype = jnp.float32 if i == n_layers - 1 else jnp.bfloat16
        hc = fused_sage_layer(cp_deep, cn_deep, sp_deep, sn_deep, hc, w1, w2, w3, b,
                              out_dtype=out_dtype)

    z = hc.astype(jnp.float32)               # (N, 2*H_last) == cat(h_pos, h_neg)

    # ----- edge-row gathers (plain JAX) -----
    pz_i = jnp.take(z, pos_edges[0], axis=0)
    pz_j = jnp.take(z, pos_edges[1], axis=0)
    pz_k = jnp.take(z, pos_surr, axis=0)
    nz_i = jnp.take(z, neg_edges[0], axis=0)
    nz_j = jnp.take(z, neg_edges[1], axis=0)
    nz_k = jnp.take(z, neg_surr, axis=0)

    loss, predictions_soft = fused_loss(pz_i, pz_j, pz_k, nz_i, nz_j, nz_k,
                                        params["regression_weights"],
                                        params["fc_weights"], target, lamb)
    return loss, z, predictions_soft


if __name__ == "__main__":
    key = jax.random.PRNGKey(0)
    N, F = 32, 16                     # nodes, node-feature dim
    neurons = [32, 32]                # args.layers
    E_pos, E_neg = 10, 8

    keys = jax.random.split(key, 8)
    X = jax.random.normal(keys[0], (N, F), dtype=jnp.float32)
    positive_edges = jax.random.randint(keys[1], (2, E_pos), 0, N)
    negative_edges = jax.random.randint(keys[2], (2, E_neg), 0, N)
    M = 3 * E_pos + 3 * E_neg
    target = jax.random.randint(keys[3], (M,), 0, 3)
    pos_surrogates = jax.random.randint(keys[4], (E_pos,), 0, N)
    neg_surrogates = jax.random.randint(keys[5], (E_neg,), 0, N)

    params = init_params(keys[6], F, neurons)

    loss, z, preds = sgcn_forward(params, X, positive_edges, negative_edges,
                                  target, pos_surrogates, neg_surrogates, lamb=1.0)
    jax.block_until_ready((loss, z, preds))
    assert z.shape == (N, 2 * neurons[-1])
    assert preds.shape == (M, 3)
    assert jnp.isfinite(loss)
    print("KERNEL_OK")
</pallas_src>

<mosaic_0001>
module attributes {stable_mosaic.version = 11 : i64} {
  func.func @_fused_sage_kernel(%arg0: i32, %arg1: i32, %arg2: memref<128x256xi8, #tpu.memory_space<vmem>>, %arg3: memref<128x256xi8, #tpu.memory_space<vmem>>, %arg4: memref<128x1xf32, #tpu.memory_space<vmem>>, %arg5: memref<128x1xf32, #tpu.memory_space<vmem>>, %arg6: memref<256x16xbf16, #tpu.memory_space<vmem>>, %arg7: memref<128x16xbf16, #tpu.memory_space<vmem>>, %arg8: memref<16x64xbf16, #tpu.memory_space<vmem>>, %arg9: memref<16x64xbf16, #tpu.memory_space<vmem>>, %arg10: memref<16x64xbf16, #tpu.memory_space<vmem>>, %arg11: memref<1x64xf32, #tpu.memory_space<vmem>>, %arg12: memref<128x64xbf16, #tpu.memory_space<vmem>>, %arg13: memref<128x16xf32, #tpu.memory_space<vmem>>, %arg14: memref<128x16xf32, #tpu.memory_space<vmem>>) attributes {dimension_semantics = [#tpu.dimension_semantics<parallel>, #tpu.dimension_semantics<arbitrary>], iteration_bounds = array<i64: 2, 1>, scalar_prefetch = 0 : i64, scratch_operands = 2 : i64, tpu.core_type = #tpu.core_type<tc>, window_params = [{transform_indices = @transform_0, window_bounds = array<i64: 128, 256>}, {transform_indices = @transform_1, window_bounds = array<i64: 128, 256>}, {transform_indices = @transform_2, window_bounds = array<i64: 128, 1>}, {transform_indices = @transform_3, window_bounds = array<i64: 128, 1>}, {transform_indices = @transform_4, window_bounds = array<i64: 256, 16>}, {transform_indices = @transform_5, window_bounds = array<i64: 128, 16>}, {pipeline_mode = #tpu.pipeline_mode<synchronous>, transform_indices = @transform_6, window_bounds = array<i64: 16, 64>}, {pipeline_mode = #tpu.pipeline_mode<synchronous>, transform_indices = @transform_7, window_bounds = array<i64: 16, 64>}, {pipeline_mode = #tpu.pipeline_mode<synchronous>, transform_indices = @transform_8, window_bounds = array<i64: 16, 64>}, {pipeline_mode = #tpu.pipeline_mode<synchronous>, transform_indices = @transform_9, window_bounds = array<i64: 1, 64>}, {transform_indices = @transform_10, window_bounds = array<i64: 128, 64>}]} {
    %c0_i32 = arith.constant 0 : i32
    %0 = arith.cmpi eq, %arg1, %c0_i32 : i32
    %1 = arith.extui %0 : i1 to i32
    %c0_i32_0 = arith.constant 0 : i32
    %2 = arith.cmpi ne, %1, %c0_i32_0 : i32
    scf.if %2 {
      %cst_17 = arith.constant 0.000000e+00 : f32
      %19 = vector.broadcast %cst_17 : f32 to vector<128x16xf32>
      %c0_18 = arith.constant 0 : index
      %c0_19 = arith.constant 0 : index
      %20 = vector.load %arg13[%c0_18, %c0_19] : memref<128x16xf32, #tpu.memory_space<vmem>>, vector<128x16xf32>
      tpu.vector_store %arg13[%c0_18, %c0_19], %19 {strides = array<i32>} : memref<128x16xf32, #tpu.memory_space<vmem>>, vector<128x16xf32>,
      %cst_20 = arith.constant 0.000000e+00 : f32
      %21 = vector.broadcast %cst_20 : f32 to vector<128x16xf32>
      %c0_21 = arith.constant 0 : index
      %c0_22 = arith.constant 0 : index
      %22 = vector.load %arg14[%c0_21, %c0_22] : memref<128x16xf32, #tpu.memory_space<vmem>>, vector<128x16xf32>
      tpu.vector_store %arg14[%c0_21, %c0_22], %21 {strides = array<i32>} : memref<128x16xf32, #tpu.memory_space<vmem>>, vector<128x16xf32>,
    } else {
    }
    %c0 = arith.constant 0 : index
    %c0_1 = arith.constant 0 : index
    %3 = vector.load %arg6[%c0, %c0_1] : memref<256x16xbf16, #tpu.memory_space<vmem>>, vector<256x16xbf16>
    %c0_2 = arith.constant 0 : index
    %c0_3 = arith.constant 0 : index
    %4 = vector.load %arg2[%c0_2, %c0_3] : memref<128x256xi8, #tpu.memory_space<vmem>>, vector<128x256xi8>
    %5 = arith.sitofp %4 : vector<128x256xi8> to vector<128x256xbf16>
    %c0_4 = arith.constant 0 : index
    %c0_5 = arith.constant 0 : index
    %6 = vector.load %arg3[%c0_4, %c0_5] : memref<128x256xi8, #tpu.memory_space<vmem>>, vector<128x256xi8>
    %7 = arith.sitofp %6 : vector<128x256xi8> to vector<128x256xbf16>
    %c0_6 = arith.constant 0 : index
    %c0_7 = arith.constant 0 : index
    %8 = vector.load %arg13[%c0_6, %c0_7] : memref<128x16xf32, #tpu.memory_space<vmem>>, vector<128x16xf32>
    %cst = arith.constant dense<0.000000e+00> : vector<128x16xf32>
    %9 = tpu.matmul %5, %3, %cst {dimension_numbers = #tpu.dot_dimension_numbers<[1], [0], [0], [1], [0, 0, 1, 1], [], []>} : vector<128x256xbf16>, vector<256x16xbf16>, vector<128x16xf32> -> vector<128x16xf32>
    %10 = arith.addf %8, %9 : vector<128x16xf32>
    %c0_8 = arith.constant 0 : index
    %c0_9 = arith.constant 0 : index
    %11 = vector.load %arg13[%c0_8, %c0_9] : memref<128x16xf32, #tpu.memory_space<vmem>>, vector<128x16xf32>
    tpu.vector_store %arg13[%c0_8, %c0_9], %10 {strides = array<i32>} : memref<128x16xf32, #tpu.memory_space<vmem>>, vector<128x16xf32>,
    %c0_10 = arith.constant 0 : index
    %c0_11 = arith.constant 0 : index
    %12 = vector.load %arg14[%c0_10, %c0_11] : memref<128x16xf32, #tpu.memory_space<vmem>>, vector<128x16xf32>
    %cst_12 = arith.constant dense<0.000000e+00> : vector<128x16xf32>
    %13 = tpu.matmul %7, %3, %cst_12 {dimension_numbers = #tpu.dot_dimension_numbers<[1], [0], [0], [1], [0, 0, 1, 1], [], []>} : vector<128x256xbf16>, vector<256x16xbf16>, vector<128x16xf32> -> vector<128x16xf32>
    %14 = arith.addf %12, %13 : vector<128x16xf32>
    %c0_13 = arith.constant 0 : index
    %c0_14 = arith.constant 0 : index
    %15 = vector.load %arg14[%c0_13, %c0_14] : memref<128x16xf32, #tpu.memory_space<vmem>>, vector<128x16xf32>
    tpu.vector_store %arg14[%c0_13, %c0_14], %14 {strides = array<i32>} : memref<128x16xf32, #tpu.memory_space<vmem>>, vector<128x16xf32>,
    %c0_i32_15 = arith.constant 0 : i32
    %16 = arith.cmpi eq, %arg1, %c0_i32_15 : i32
    %17 = arith.extui %16 : i1 to i32
    %c0_i32_16 = arith.constant 0 : i32
    %18 = arith.cmpi ne, %17, %c0_i32_16 : i32
    scf.if %18 {
      %c0_17 = arith.constant 0 : index
      %c0_18 = arith.constant 0 : index
      %19 = vector.load %arg13[%c0_17, %c0_18] : memref<128x16xf32, #tpu.memory_space<vmem>>, vector<128x16xf32>
      %c0_19 = arith.constant 0 : index
      %c0_20 = arith.constant 0 : index
      %20 = vector.load %arg4[%c0_19, %c0_20] : memref<128x1xf32, #tpu.memory_space<vmem>>, vector<128x1xf32>
      %21 = vector.broadcast %20 : vector<128x1xf32> to vector<128x16xf32>
      %22 = arith.mulf %19, %21 : vector<128x16xf32>
      %23 = arith.truncf %22 : vector<128x16xf32> to vector<128x16xbf16>
      %c0_21 = arith.constant 0 : index
      %c0_22 = arith.constant 0 : index
      %24 = vector.load %arg14[%c0_21, %c0_22] : memref<128x16xf32, #tpu.memory_space<vmem>>, vector<128x16xf32>
      %c0_23 = arith.constant 0 : index
      %c0_24 = arith.constant 0 : index
      %25 = vector.load %arg5[%c0_23, %c0_24] : memref<128x1xf32, #tpu.memory_space<vmem>>, vector<128x1xf32>
      %26 = vector.broadcast %25 : vector<128x1xf32> to vector<128x16xf32>
      %27 = arith.mulf %24, %26 : vector<128x16xf32>
      %28 = arith.truncf %27 : vector<128x16xf32> to vector<128x16xbf16>
      %c0_25 = arith.constant 0 : index
      %c0_26 = arith.constant 0 : index
      %29 = vector.load %arg8[%c0_25, %c0_26] : memref<16x64xbf16, #tpu.memory_space<vmem>>, vector<16x64xbf16>
      %cst_27 = arith.constant dense<0.000000e+00> : vector<128x64xf32>
      %30 = tpu.matmul %23, %29, %cst_27 {dimension_numbers = #tpu.dot_dimension_numbers<[1], [0], [0], [1], [0, 0, 1, 1], [], []>} : vector<128x16xbf16>, vector<16x64xbf16>, vector<128x64xf32> -> vector<128x64xf32>
      %c0_28 = arith.constant 0 : index
      %c0_29 = arith.constant 0 : index
      %31 = vector.load %arg9[%c0_28, %c0_29] : memref<16x64xbf16, #tpu.memory_space<vmem>>, vector<16x64xbf16>
      %cst_30 = arith.constant dense<0.000000e+00> : vector<128x64xf32>
      %32 = tpu.matmul %28, %31, %cst_30 {dimension_numbers = #tpu.dot_dimension_numbers<[1], [0], [0], [1], [0, 0, 1, 1], [], []>} : vector<128x16xbf16>, vector<16x64xbf16>, vector<128x64xf32> -> vector<128x64xf32>
      %33 = arith.addf %30, %32 : vector<128x64xf32>
      %c0_31 = arith.constant 0 : index
      %c0_32 = arith.constant 0 : index
      %34 = vector.load %arg7[%c0_31, %c0_32] : memref<128x16xbf16, #tpu.memory_space<vmem>>, vector<128x16xbf16>
      %c0_33 = arith.constant 0 : index
      %c0_34 = arith.constant 0 : index
      %35 = vector.load %arg10[%c0_33, %c0_34] : memref<16x64xbf16, #tpu.memory_space<vmem>>, vector<16x64xbf16>
      %cst_35 = arith.constant dense<0.000000e+00> : vector<128x64xf32>
      %36 = tpu.matmul %34, %35, %cst_35 {dimension_numbers = #tpu.dot_dimension_numbers<[1], [0], [0], [1], [0, 0, 1, 1], [], []>} : vector<128x16xbf16>, vector<16x64xbf16>, vector<128x64xf32> -> vector<128x64xf32>
      %37 = arith.addf %33, %36 : vector<128x64xf32>
      %c0_36 = arith.constant 0 : index
      %c0_37 = arith.constant 0 : index
      %38 = vector.load %arg11[%c0_36, %c0_37] : memref<1x64xf32, #tpu.memory_space<vmem>>, vector<1x64xf32>
      %39 = vector.broadcast %38 : vector<1x64xf32> to vector<128x64xf32>
      %40 = arith.addf %37, %39 : vector<128x64xf32>
      %41 = vector.extract_strided_slice %40 {offsets = [0, 0], sizes = [128, 32], strides = [1, 1]} : vector<128x64xf32> to vector<128x32xf32>
      %42 = vector.extract_strided_slice %40 {offsets = [0, 32], sizes = [128, 32], strides = [1, 1]} : vector<128x64xf32> to vector<128x32xf32>
      %43 = arith.mulf %41, %41 : vector<128x32xf32>
      %cst_38 = arith.constant dense<0.000000e+00> : vector<128xf32>
      %44 = vector.multi_reduction <add>, %43, %cst_38 [1] : vector<128x32xf32> to vector<128xf32>
      %45 = vector.shape_cast %44 : vector<128xf32> to vector<128x1xf32>
      %cst_39 = arith.constant 1.000000e-24 : f32
      %46 = vector.broadcast %cst_39 : f32 to vector<128x1xf32>
      %47 = arith.maximumf %45, %46 : vector<128x1xf32>
      %48 = math.rsqrt %47 : vector<128x1xf32>
      %49 = arith.mulf %42, %42 : vector<128x32xf32>
      %cst_40 = arith.constant dense<0.000000e+00> : vector<128xf32>
      %50 = vector.multi_reduction <add>, %49, %cst_40 [1] : vector<128x32xf32> to vector<128xf32>
      %51 = vector.shape_cast %50 : vector<128xf32> to vector<128x1xf32>
      %cst_41 = arith.constant 1.000000e-24 : f32
      %52 = vector.broadcast %cst_41 : f32 to vector<128x1xf32>
      %53 = arith.maximumf %51, %52 : vector<128x1xf32>
      %54 = math.rsqrt %53 : vector<128x1xf32>
      %55 = vector.broadcast %48 : vector<128x1xf32> to vector<128x32xf32>
      %56 = arith.mulf %41, %55 : vector<128x32xf32>
      %57 = vector.broadcast %54 : vector<128x1xf32> to vector<128x32xf32>
      %58 = arith.mulf %42, %57 : vector<128x32xf32>
      %59 = tpu.concatenate %56, %58 in 1 : vector<128x32xf32>, vector<128x32xf32> -> vector<128x64xf32>
      %60 = math.tanh %59 : vector<128x64xf32>
      %61 = arith.truncf %60 : vector<128x64xf32> to vector<128x64xbf16>
      %c0_42 = arith.constant 0 : index
      %c0_43 = arith.constant 0 : index
      %62 = vector.load %arg12[%c0_42, %c0_43] : memref<128x64xbf16, #tpu.memory_space<vmem>>, vector<128x64xbf16>
      tpu.vector_store %arg12[%c0_42, %c0_43], %61 {strides = array<i32>} : memref<128x64xbf16, #tpu.memory_space<vmem>>, vector<128x64xbf16>,
    } else {
    }
    return
  }
  func.func @transform_0(%arg0: i32, %arg1: i32) -> (i32, i32) {
    %c0_i32 = arith.constant 0 : i32
    return %arg0, %arg1 : i32, i32
  }
  func.func @transform_1(%arg0: i32, %arg1: i32) -> (i32, i32) {
    %c0_i32 = arith.constant 0 : i32
    return %arg0, %arg1 : i32, i32
  }
  func.func @transform_2(%arg0: i32, %arg1: i32) -> (i32, i32) {
    %c0_i32 = arith.constant 0 : i32
    %c0_i32_0 = arith.constant 0 : i32
    return %arg0, %c0_i32 : i32, i32
  }
  func.func @transform_3(%arg0: i32, %arg1: i32) -> (i32, i32) {
    %c0_i32 = arith.constant 0 : i32
    %c0_i32_0 = arith.constant 0 : i32
    return %arg0, %c0_i32 : i32, i32
  }
  func.func @transform_4(%arg0: i32, %arg1: i32) -> (i32, i32) {
    %c0_i32 = arith.constant 0 : i32
    %c0_i32_0 = arith.constant 0 : i32
    return %arg1, %c0_i32 : i32, i32
  }
  func.func @transform_5(%arg0: i32, %arg1: i32) -> (i32, i32) {
    %c0_i32 = arith.constant 0 : i32
    %c0_i32_0 = arith.constant 0 : i32
    return %arg0, %c0_i32 : i32, i32
  }
  func.func @transform_6(%arg0: i32, %arg1: i32) -> (i32, i32) {
    %c0_i32 = arith.constant 0 : i32
    %c0_i32_0 = arith.constant 0 : i32
    %c0_i32_1 = arith.constant 0 : i32
    return %c0_i32, %c0_i32_0 : i32, i32
  }
  func.func @transform_7(%arg0: i32, %arg1: i32) -> (i32, i32) {
    %c0_i32 = arith.constant 0 : i32
    %c0_i32_0 = arith.constant 0 : i32
    %c0_i32_1 = arith.constant 0 : i32
    return %c0_i32, %c0_i32_0 : i32, i32
  }
  func.func @transform_8(%arg0: i32, %arg1: i32) -> (i32, i32) {
    %c0_i32 = arith.constant 0 : i32
    %c0_i32_0 = arith.constant 0 : i32
    %c0_i32_1 = arith.constant 0 : i32
    return %c0_i32, %c0_i32_0 : i32, i32
  }
  func.func @transform_9(%arg0: i32, %arg1: i32) -> (i32, i32) {
    %c0_i32 = arith.constant 0 : i32
    %c0_i32_0 = arith.constant 0 : i32
    %c0_i32_1 = arith.constant 0 : i32
    return %c0_i32, %c0_i32_0 : i32, i32
  }
  func.func @transform_10(%arg0: i32, %arg1: i32) -> (i32, i32) {
    %c0_i32 = arith.constant 0 : i32
    %c0_i32_0 = arith.constant 0 : i32
    return %arg0, %c0_i32 : i32, i32
  }
}

</mosaic_0001>

<llo_original>
// kernel: tpu_custom_call.1
$region0: #{tpu_custom_call.1}
  #allocation0 [shape = 'u32[]', space=smem, size = 0x4, offset = 0x4, fixed_abs, tag = 'smem constant byte address 0x4 - core index']
  #allocation1 [shape = 'u32[144,128]{1,0:T(1,128)}', space=vmem, size = 0x12000, scoped, tag = 'internal scratch']
  #allocation2 [shape = 'f32[128,16]{1,0:T(8,128)}', space=vmem, size = 0x10000, scoped, tag = 'scratch operand']
  #allocation3 [shape = 'f32[128,16]{1,0:T(8,128)}', space=vmem, size = 0x10000, scoped, tag = 'scratch operand']
  %s0 = inlined_call_operand.vmem [shape: s8[256,256], index: 0, kind: input, shape index: {}]
  %s1 = inlined_call_operand.vmem [shape: s8[256,256], index: 1, kind: input, shape index: {}]
  %s2 = inlined_call_operand.vmem [shape: f32[256,1], index: 2, kind: input, shape index: {}]
  %s3 = inlined_call_operand.vmem [shape: f32[256,1], index: 3, kind: input, shape index: {}]
  %s4 = inlined_call_operand.vmem [shape: bf16[256,16], index: 4, kind: input, shape index: {}]
  %s5 = inlined_call_operand.vmem [shape: bf16[256,16], index: 5, kind: input, shape index: {}]
  %s6 = inlined_call_operand.vmem [shape: bf16[16,64], index: 6, kind: input, shape index: {}]
  %s7 = inlined_call_operand.vmem [shape: bf16[16,64], index: 7, kind: input, shape index: {}]
  %s8 = inlined_call_operand.vmem [shape: bf16[16,64], index: 8, kind: input, shape index: {}]
  %s9 = inlined_call_operand.vmem [shape: f32[1,64], index: 9, kind: input, shape index: {}]
  %s10 = inlined_call_operand.vmem [shape: bf16[256,64], index: 10, kind: output, shape index: {}]
  %s11 = sld [smem:[#allocation0]]
  $region81: #{tpu_custom_call.1} parent=0
    _
  %s13 = ssub.s32 1, %s11
  %s14 = scalar_select 0, %s13, %s11
  loop: start=0, step=1, limit=4
  $region2: #{tpu_custom_call.1} parent=0 // loop_pre_header
    _
  $region3: #{tpu_custom_call.1} parent=0 // loop_header
    %s16 = sphi 0, %s20
    %p17 = scmp.ge.s32.totalorder %s16, 4
    %s23 = sphi 0, %s35
    %s24 = sphi 0, %s31
    %s25 = sphi 0, %s23
    %s26 = sphi 0, %s24
    %s27 = sphi 0, %s25
    %s28 = sphi 0, %s26
    %s40 = sphi 0, %s42
    %s43 = sphi 0, %s40
    %s44 = sphi 0, %s43
    %s60 = sphi 0, %s44
    %s68 = sphi 0, %s70
    %s71 = sphi 0, %s68
    %s72 = sphi 0, %s71
    %s88 = sphi 0, %s72
    %s94 = sphi 0, %s96
    %s97 = sphi 0, %s94
    %s98 = sphi 0, %s97
    %s114 = sphi 0, %s98
    %s120 = sphi 0, %s122
    %s123 = sphi 0, %s120
    %s124 = sphi 0, %s123
    %s140 = sphi 0, %s124
    %s146 = sphi 0, %s148
    %s149 = sphi 0, %s146
    %s150 = sphi 0, %s149
    %s166 = sphi 0, %s150
    %s172 = sphi 0, %s174
    %s175 = sphi 0, %s172
    %s176 = sphi 0, %s175
    %s192 = sphi 0, %s176
    %s196 = sphi 0, %s196
    %s198 = sphi 0, %s196
    %s199 = sphi 0, %s198
    %s213 = sphi 0, %s199
    %s217 = sphi 0, %s217
    %s219 = sphi 0, %s217
    %s220 = sphi 0, %s219
    %s234 = sphi 0, %s220
    %s238 = sphi 0, %s238
    %s240 = sphi 0, %s238
    %s241 = sphi 0, %s240
    %s255 = sphi 0, %s241
    %s259 = sphi 0, %s259
    %s261 = sphi 0, %s259
    %s262 = sphi 0, %s261
    %s276 = sphi 0, %s262
    %s282 = sphi 0, %s284
    %s285 = sphi 0, %s282
    %s286 = sphi 0, %s285
    %s302 = sphi 0, %s286
  $region4: #{tpu_custom_call.1} parent=0 // loop_header_branch
    %19 = sbr.rel (%p17) target = $region8
  $region5: #{tpu_custom_call.1} parent=0 // loop_body
    %s21 = ssub.s32 %s16, 1
    %s22 = ssub.s32 %s16, 2
    %s29 = sadd.s32 1, %s24
    %p30 = scmp.ge.s32.totalorder %s29, 1
    %s31 = scalar_select %p30, 0, %s29
    %s32 = sadd.s32 1, %s23
    %s33 = scalar_select %p30, %s32, %s23
    %p34 = scmp.ge.s32.totalorder %s33, 2
    %s35 = scalar_select %p34, 0, %s33
    %s36 = ssub.s32 %s23, %s35
    %s37 = ssub.s32 %s24, %s31
    %s38 = sor.u32 %s36, %s37
    %p39 = scmp.eq.s32.totalorder %s38, 0
    %s41 = sadd.s32 %s40, 1
    %s42 = scalar_select %p39, %s40, %s41
    %p45 = pneg %p39
    %p46 = scmp.eq.s32.totalorder %s16, 1
    %p47 = por %p45, %p46
    %p48 = scmp.ne.s32.totalorder %s40, %s43
    %p49 = scmp.eq.s32.totalorder %s16, 0
    %p50 = por %p48, %p49
    %p51 = scmp.ne.s32.totalorder %s40, %s43
    %p52 = scmp.eq.s32.totalorder %s21, 1
    %p53 = por %p51, %p52
    %p54 = scmp.ne.s32.totalorder %s43, %s44
    %p55 = scmp.eq.s32.totalorder %s21, 0
    %p56 = por %p54, %p55
    %p57 = scmp.ne.s32.totalorder %s43, %s44
    %p58 = scmp.eq.s32.totalorder %s22, 1
    %p59 = por %p57, %p58
    %p61 = scmp.ne.s32.totalorder %s44, %s60
    %p62 = scmp.eq.s32.totalorder %s22, 0
    %p63 = por %p61, %p62
    %s64 = ssub.s32 %s23, %s35
    %s65 = ssub.s32 %s24, %s31
    %s66 = sor.u32 %s64, %s65
    %p67 = scmp.eq.s32.totalorder %s66, 0
    %s69 = sadd.s32 %s68, 1
    %s70 = scalar_select %p67, %s68, %s69
    %p73 = pneg %p67
    %p74 = scmp.eq.s32.totalorder %s16, 1
    %p75 = por %p73, %p74
    %p76 = scmp.ne.s32.totalorder %s68, %s71
    %p77 = scmp.eq.s32.totalorder %s16, 0
    %p78 = por %p76, %p77
    %p79 = scmp.ne.s32.totalorder %s68, %s71
    %p80 = scmp.eq.s32.totalorder %s21, 1
    %p81 = por %p79, %p80
    %p82 = scmp.ne.s32.totalorder %s71, %s72
    %p83 = scmp.eq.s32.totalorder %s21, 0
    %p84 = por %p82, %p83
    %p85 = scmp.ne.s32.totalorder %s71, %s72
    %p86 = scmp.eq.s32.totalorder %s22, 1
    %p87 = por %p85, %p86
    %p89 = scmp.ne.s32.totalorder %s72, %s88
    %p90 = scmp.eq.s32.totalorder %s22, 0
    %p91 = por %p89, %p90
    %s92 = ssub.s32 %s23, %s35
    %p93 = scmp.eq.s32.totalorder %s92, 0
    %s95 = sadd.s32 %s94, 1
    %s96 = scalar_select %p93, %s94, %s95
    %p99 = pneg %p93
    %p100 = scmp.eq.s32.totalorder %s16, 1
    %p101 = por %p99, %p100
    %p102 = scmp.ne.s32.totalorder %s94, %s97
    %p103 = scmp.eq.s32.totalorder %s16, 0
    %p104 = por %p102, %p103
    %p105 = scmp.ne.s32.totalorder %s94, %s97
    %p106 = scmp.eq.s32.totalorder %s21, 1
    %p107 = por %p105, %p106
    %p108 = scmp.ne.s32.totalorder %s97, %s98
    %p109 = scmp.eq.s32.totalorder %s21, 0
    %p110 = por %p108, %p109
    %p111 = scmp.ne.s32.totalorder %s97, %s98
    %p112 = scmp.eq.s32.totalorder %s22, 1
    %p113 = por %p111, %p112
    %p115 = scmp.ne.s32.totalorder %s98, %s114
    %p116 = scmp.eq.s32.totalorder %s22, 0
    %p117 = por %p115, %p116
    %s118 = ssub.s32 %s23, %s35
    %p119 = scmp.eq.s32.totalorder %s118, 0
    %s121 = sadd.s32 %s120, 1
    %s122 = scalar_select %p119, %s120, %s121
    %p125 = pneg %p119
    %p126 = scmp.eq.s32.totalorder %s16, 1
    %p127 = por %p125, %p126
    %p128 = scmp.ne.s32.totalorder %s120, %s123
    %p129 = scmp.eq.s32.totalorder %s16, 0
    %p130 = por %p128, %p129
    %p131 = scmp.ne.s32.totalorder %s120, %s123
    %p132 = scmp.eq.s32.totalorder %s21, 1
    %p133 = por %p131, %p132
    %p134 = scmp.ne.s32.totalorder %s123, %s124
    %p135 = scmp.eq.s32.totalorder %s21, 0
    %p136 = por %p134, %p135
    %p137 = scmp.ne.s32.totalorder %s123, %s124
    %p138 = scmp.eq.s32.totalorder %s22, 1
    %p139 = por %p137, %p138
    %p141 = scmp.ne.s32.totalorder %s124, %s140
    %p142 = scmp.eq.s32.totalorder %s22, 0
    %p143 = por %p141, %p142
    %s144 = ssub.s32 %s24, %s31
    %p145 = scmp.eq.s32.totalorder %s144, 0
    %s147 = sadd.s32 %s146, 1
    %s148 = scalar_select %p145, %s146, %s147
    %p151 = pneg %p145
    %p152 = scmp.eq.s32.totalorder %s16, 1
    %p153 = por %p151, %p152
    %p154 = scmp.ne.s32.totalorder %s146, %s149
    %p155 = scmp.eq.s32.totalorder %s16, 0
    %p156 = por %p154, %p155
    %p157 = scmp.ne.s32.totalorder %s146, %s149
    %p158 = scmp.eq.s32.totalorder %s21, 1
    %p159 = por %p157, %p158
    %p160 = scmp.ne.s32.totalorder %s149, %s150
    %p161 = scmp.eq.s32.totalorder %s21, 0
    %p162 = por %p160, %p161
    %p163 = scmp.ne.s32.totalorder %s149, %s150
    %p164 = scmp.eq.s32.totalorder %s22, 1
    %p165 = por %p163, %p164
    %p167 = scmp.ne.s32.totalorder %s150, %s166
    %p168 = scmp.eq.s32.totalorder %s22, 0
    %p169 = por %p167, %p168
    %s170 = ssub.s32 %s23, %s35
    %p171 = scmp.eq.s32.totalorder %s170, 0
    %s173 = sadd.s32 %s172, 1
    %s174 = scalar_select %p171, %s172, %s173
    %p177 = pneg %p171
    %p178 = scmp.eq.s32.totalorder %s16, 1
    %p179 = por %p177, %p178
    %p180 = scmp.ne.s32.totalorder %s172, %s175
    %p181 = scmp.eq.s32.totalorder %s16, 0
    %p182 = por %p180, %p181
    %p183 = scmp.ne.s32.totalorder %s172, %s175
    %p184 = scmp.eq.s32.totalorder %s21, 1
    %p185 = por %p183, %p184
    %p186 = scmp.ne.s32.totalorder %s175, %s176
    %p187 = scmp.eq.s32.totalorder %s21, 0
    %p188 = por %p186, %p187
    %p189 = scmp.ne.s32.totalorder %s175, %s176
    %p190 = scmp.eq.s32.totalorder %s22, 1
    %p191 = por %p189, %p190
    %p193 = scmp.ne.s32.totalorder %s176, %s192
    %p194 = scmp.eq.s32.totalorder %s22, 0
    %p195 = por %p193, %p194
    %s197 = sadd.s32 %s196, 1
    %p200 = scmp.eq.s32.totalorder %s16, 1
    %p201 = scmp.ne.s32.totalorder %s196, %s198
    %p202 = scmp.eq.s32.totalorder %s16, 0
    %p203 = por %p201, %p202
    %p204 = scmp.ne.s32.totalorder %s196, %s198
    %p205 = scmp.eq.s32.totalorder %s21, 1
    %p206 = por %p204, %p205
    %p207 = scmp.ne.s32.totalorder %s198, %s199
    %p208 = scmp.eq.s32.totalorder %s21, 0
    %p209 = por %p207, %p208
    %p210 = scmp.ne.s32.totalorder %s198, %s199
    %p211 = scmp.eq.s32.totalorder %s22, 1
    %p212 = por %p210, %p211
    %p214 = scmp.ne.s32.totalorder %s199, %s213
    %p215 = scmp.eq.s32.totalorder %s22, 0
    %p216 = por %p214, %p215
    %s218 = sadd.s32 %s217, 1
    %p221 = scmp.eq.s32.totalorder %s16, 1
    %p222 = scmp.ne.s32.totalorder %s217, %s219
    %p223 = scmp.eq.s32.totalorder %s16, 0
    %p224 = por %p222, %p223
    %p225 = scmp.ne.s32.totalorder %s217, %s219
    %p226 = scmp.eq.s32.totalorder %s21, 1
    %p227 = por %p225, %p226
    %p228 = scmp.ne.s32.totalorder %s219, %s220
    %p229 = scmp.eq.s32.totalorder %s21, 0
    %p230 = por %p228, %p229
    %p231 = scmp.ne.s32.totalorder %s219, %s220
    %p232 = scmp.eq.s32.totalorder %s22, 1
    %p233 = por %p231, %p232
    %p235 = scmp.ne.s32.totalorder %s220, %s234
    %p236 = scmp.eq.s32.totalorder %s22, 0
    %p237 = por %p235, %p236
    %s239 = sadd.s32 %s238, 1
    %p242 = scmp.eq.s32.totalorder %s16, 1
    %p243 = scmp.ne.s32.totalorder %s238, %s240
    %p244 = scmp.eq.s32.totalorder %s16, 0
    %p245 = por %p243, %p244
    %p246 = scmp.ne.s32.totalorder %s238, %s240
    %p247 = scmp.eq.s32.totalorder %s21, 1
    %p248 = por %p246, %p247
    %p249 = scmp.ne.s32.totalorder %s240, %s241
    %p250 = scmp.eq.s32.totalorder %s21, 0
    %p251 = por %p249, %p250
    %p252 = scmp.ne.s32.totalorder %s240, %s241
    %p253 = scmp.eq.s32.totalorder %s22, 1
    %p254 = por %p252, %p253
    %p256 = scmp.ne.s32.totalorder %s241, %s255
    %p257 = scmp.eq.s32.totalorder %s22, 0
    %p258 = por %p256, %p257
    %s260 = sadd.s32 %s259, 1
    %p263 = scmp.eq.s32.totalorder %s16, 1
    %p264 = scmp.ne.s32.totalorder %s259, %s261
    %p265 = scmp.eq.s32.totalorder %s16, 0
    %p266 = por %p264, %p265
    %p267 = scmp.ne.s32.totalorder %s259, %s261
    %p268 = scmp.eq.s32.totalorder %s21, 1
    %p269 = por %p267, %p268
    %p270 = scmp.ne.s32.totalorder %s261, %s262
    %p271 = scmp.eq.s32.totalorder %s21, 0
    %p272 = por %p270, %p271
    %p273 = scmp.ne.s32.totalorder %s261, %s262
    %p274 = scmp.eq.s32.totalorder %s22, 1
    %p275 = por %p273, %p274
    %p277 = scmp.ne.s32.totalorder %s262, %s276
    %p278 = scmp.eq.s32.totalorder %s22, 0
    %p279 = por %p277, %p278
    %s280 = ssub.s32 %s23, %s35
    %p281 = scmp.eq.s32.totalorder %s280, 0
    %s283 = sadd.s32 %s282, 1
    %s284 = scalar_select %p281, %s282, %s283
    %p287 = pneg %p281
    %p288 = scmp.eq.s32.totalorder %s16, 1
    %p289 = por %p287, %p288
    %p290 = scmp.ne.s32.totalorder %s282, %s285
    %p291 = scmp.eq.s32.totalorder %s16, 0
    %p292 = por %p290, %p291
    %p293 = scmp.ne.s32.totalorder %s282, %s285
    %p294 = scmp.eq.s32.totalorder %s21, 1
    %p295 = por %p293, %p294
    %p296 = scmp.ne.s32.totalorder %s285, %s286
    %p297 = scmp.eq.s32.totalorder %s21, 0
    %p298 = por %p296, %p297
    %p299 = scmp.ne.s32.totalorder %s285, %s286
    %p300 = scmp.eq.s32.totalorder %s22, 1
    %p301 = por %p299, %p300
    %p303 = scmp.ne.s32.totalorder %s286, %s302
    %p304 = scmp.eq.s32.totalorder %s22, 0
    %p305 = por %p303, %p304
    %p306 = scmp.le.s32.totalorder 1, %s16
    %p307 = scmp.lt.s32.totalorder %s16, 3
    %p308 = pnand %p306, %p307
    %p309 = pneg %p308
    // Predicated region
    $region9: #{tpu_custom_call.1} parent=5 // pred_check
      _
    $region10: #{tpu_custom_call.1} parent=5 // pred_check_branch
      %311 = sbr.rel (%p308) target = $region12
    $region11: #{tpu_custom_call.1} parent=5 // pred_region
      %s312 = ssub.s32 %s16, 1
      // Predicated region
      $region13: #{tpu_custom_call.1} parent=11 // pred_check
        %p313 = pneg %p162
      $region14: #{tpu_custom_call.1} parent=11 // pred_check_branch
        %315 = sbr.rel (%p313) target = $region16
      $region15: #{tpu_custom_call.1} parent=11 // pred_region
        %s316 = smul.u32 32, %s26
        %p317 = scmp.lt.s32.totalorder %s316, 31
        %s318 = scalar_select %p317, %s316, 31
        %s319 = smul.addr %s318, 4
        %s320 = scalar_lea.vmem %s4, %s319
        %s321 = smul.u32 32, %s26
      $region16: #{tpu_custom_call.1} parent=11 // pred_fallthru
        _
      // Predicated region
      $region17: #{tpu_custom_call.1} parent=11 // pred_check
        %p322 = pneg %p209
      $region18: #{tpu_custom_call.1} parent=11 // pred_check_branch
        %324 = sbr.rel (%p322) target = $region20
      $region19: #{tpu_custom_call.1} parent=11 // pred_region
        _
      $region20: #{tpu_custom_call.1} parent=11 // pred_fallthru
        _
      // Predicated region
      $region21: #{tpu_custom_call.1} parent=11 // pred_check
        %p325 = pneg %p230
      $region22: #{tpu_custom_call.1} parent=11 // pred_check_branch
        %327 = sbr.rel (%p325) target = $region24
      $region23: #{tpu_custom_call.1} parent=11 // pred_region
        _
      $region24: #{tpu_custom_call.1} parent=11 // pred_fallthru
        _
      // Predicated region
      $region25: #{tpu_custom_call.1} parent=11 // pred_check
        %p328 = pneg %p251
      $region26: #{tpu_custom_call.1} parent=11 // pred_check_branch
        %330 = sbr.rel (%p328) target = $region28
      $region27: #{tpu_custom_call.1} parent=11 // pred_region
        _
      $region28: #{tpu_custom_call.1} parent=11 // pred_fallthru
        _
      // Predicated region
      $region29: #{tpu_custom_call.1} parent=11 // pred_check
        %p331 = pneg %p272
      $region30: #{tpu_custom_call.1} parent=11 // pred_check_branch
        %333 = sbr.rel (%p331) target = $region32
      $region31: #{tpu_custom_call.1} parent=11 // pred_region
        _
      $region32: #{tpu_custom_call.1} parent=11 // pred_fallthru
        _
    $region12: #{tpu_custom_call.1} parent=5 // pred_fallthru
      _
    %p334 = scmp.lt.s32.totalorder %s16, 2
    // Predicated region
    $region33: #{tpu_custom_call.1} parent=5 // pred_check
      %p335 = pneg %p334
    $region34: #{tpu_custom_call.1} parent=5 // pred_check_branch
      %337 = sbr.rel (%p335) target = $region36
    $region35: #{tpu_custom_call.1} parent=5 // pred_region
      // Predicated region
      $region37: #{tpu_custom_call.1} parent=35 // pred_check
        %p338 = pneg %p50
      $region38: #{tpu_custom_call.1} parent=35 // pred_check_branch
        %340 = sbr.rel (%p338) target = $region40
      $region39: #{tpu_custom_call.1} parent=35 // pred_region
        %s341 = smul.u32 4, %s23
        %s342 = smul.u32 2, %s24
        %p343 = scmp.lt.s32.totalorder %s341, 7
        %s344 = scalar_select %p343, %s341, 7
        %p345 = scmp.lt.s32.totalorder %s342, 1
        %s346 = scalar_select %p345, %s342, 1
        %s347 = smul.addr %s344, 2
        %s348 = sadd.s32 %s346, %s347
        %s349 = smul.addr %s348, 8
        %s350 = scalar_lea.vmem %s0, %s349
        %s351 = smul.u32 4, %s23
        %s352 = smul.u32 2, %s24
      $region40: #{tpu_custom_call.1} parent=35 // pred_fallthru
        _
      // Predicated region
      $region41: #{tpu_custom_call.1} parent=35 // pred_check
        %p353 = pneg %p78
      $region42: #{tpu_custom_call.1} parent=35 // pred_check_branch
        %355 = sbr.rel (%p353) target = $region44
      $region43: #{tpu_custom_call.1} parent=35 // pred_region
        %s356 = smul.u32 4, %s23
        %s357 = smul.u32 2, %s24
        %p358 = scmp.lt.s32.totalorder %s356, 7
        %s359 = scalar_select %p358, %s356, 7
        %p360 = scmp.lt.s32.totalorder %s357, 1
        %s361 = scalar_select %p360, %s357, 1
        %s362 = smul.addr %s359, 2
        %s363 = sadd.s32 %s361, %s362
        %s364 = smul.addr %s363, 8
        %s365 = scalar_lea.vmem %s1, %s364
        %s366 = smul.u32 4, %s23
        %s367 = smul.u32 2, %s24
      $region44: #{tpu_custom_call.1} parent=35 // pred_fallthru
        _
      // Predicated region
      $region45: #{tpu_custom_call.1} parent=35 // pred_check
        %p368 = pneg %p104
      $region46: #{tpu_custom_call.1} parent=35 // pred_check_branch
        %370 = sbr.rel (%p368) target = $region48
      $region47: #{tpu_custom_call.1} parent=35 // pred_region
        %s371 = smul.u32 16, %s23
        %p372 = scmp.lt.s32.totalorder %s371, 31
        %s373 = scalar_select %p372, %s371, 31
        %s374 = smul.addr %s373, 8
        %s375 = scalar_lea.vmem %s2, %s374
        %s376 = smul.u32 16, %s23
      $region48: #{tpu_custom_call.1} parent=35 // pred_fallthru
        _
      // Predicated region
      $region49: #{tpu_custom_call.1} parent=35 // pred_check
        %p377 = pneg %p130
      $region50: #{tpu_custom_call.1} parent=35 // pred_check_branch
        %379 = sbr.rel (%p377) target = $region52
      $region51: #{tpu_custom_call.1} parent=35 // pred_region
        %s380 = smul.u32 16, %s23
        %p381 = scmp.lt.s32.totalorder %s380, 31
        %s382 = scalar_select %p381, %s380, 31
        %s383 = smul.addr %s382, 8
        %s384 = scalar_lea.vmem %s3, %s383
        %s385 = smul.u32 16, %s23
      $region52: #{tpu_custom_call.1} parent=35 // pred_fallthru
        _
      // Predicated region
      $region53: #{tpu_custom_call.1} parent=35 // pred_check
        %p386 = pneg %p182
      $region54: #{tpu_custom_call.1} parent=35 // pred_check_branch
        %388 = sbr.rel (%p386) target = $region56
      $region55: #{tpu_custom_call.1} parent=35 // pred_region
        %s389 = smul.u32 16, %s23
        %p390 = scmp.lt.s32.totalorder %s389, 31
        %s391 = scalar_select %p390, %s389, 31
        %s392 = smul.addr %s391, 4
        %s393 = scalar_lea.vmem %s5, %s392
        %s394 = smul.u32 16, %s23
      $region56: #{tpu_custom_call.1} parent=35 // pred_fallthru
        _
    $region36: #{tpu_custom_call.1} parent=5 // pred_fallthru
      _
    %p395 = scmp.le.s32.totalorder 1, %s16
    %p396 = scmp.lt.s32.totalorder %s16, 3
    %p397 = pnand %p395, %p396
    %p398 = pneg %p397
    // Predicated region
    $region57: #{tpu_custom_call.1} parent=5 // pred_check
      _
    $region58: #{tpu_custom_call.1} parent=5 // pred_check_branch
      %400 = sbr.rel (%p397) target = $region60
    $region59: #{tpu_custom_call.1} parent=5 // pred_region
      %s401 = ssub.s32 %s16, 1
      %s402 = smul.u32 4, %s25
      %s403 = smul.u32 2, %s26
      %p404 = scmp.lt.s32.totalorder %s402, 7
      %s405 = scalar_select %p404, %s402, 7
      %p406 = scmp.lt.s32.totalorder %s403, 1
      %s407 = scalar_select %p406, %s403, 1
      %s408 = smul.addr %s405, 2
      %s409 = sadd.s32 %s407, %s408
      %s410 = smul.addr %s409, 8
      %s411 = scalar_lea.vmem %s0, %s410
      %p412 = pneg %p56
      %p413 = pneg %p53
      %s414 = smul.u32 4, %s25
      %s415 = smul.u32 2, %s26
      %p416 = scmp.lt.s32.totalorder %s414, 7
      %s417 = scalar_select %p416, %s414, 7
      %p418 = scmp.lt.s32.totalorder %s415, 1
      %s419 = scalar_select %p418, %s415, 1
      %s420 = smul.addr %s417, 2
      %s421 = sadd.s32 %s419, %s420
      %s422 = smul.addr %s421, 8
      %s423 = scalar_lea.vmem %s1, %s422
      %p424 = pneg %p84
      %p425 = pneg %p81
      %s426 = smul.u32 16, %s25
      %p427 = scmp.lt.s32.totalorder %s426, 31
      %s428 = scalar_select %p427, %s426, 31
      %s429 = smul.addr %s428, 8
      %s430 = scalar_lea.vmem %s2, %s429
      %p431 = pneg %p110
      %p432 = pneg %p107
      %s433 = smul.u32 16, %s25
      %p434 = scmp.lt.s32.totalorder %s433, 31
      %s435 = scalar_select %p434, %s433, 31
      %s436 = smul.addr %s435, 8
      %s437 = scalar_lea.vmem %s3, %s436
      %p438 = pneg %p136
      %p439 = pneg %p133
      %s440 = smul.u32 32, %s26
      %p441 = scmp.lt.s32.totalorder %s440, 31
      %s442 = scalar_select %p441, %s440, 31
      %s443 = smul.addr %s442, 4
      %s444 = scalar_lea.vmem %s4, %s443
      %p445 = pneg %p162
      %p446 = pneg %p159
      %s447 = smul.u32 16, %s25
      %p448 = scmp.lt.s32.totalorder %s447, 31
      %s449 = scalar_select %p448, %s447, 31
      %s450 = smul.addr %s449, 4
      %s451 = scalar_lea.vmem %s5, %s450
      %p452 = pneg %p188
      %p453 = pneg %p185
      %p454 = pneg %p209
      %p455 = pneg %p206
      %p456 = pneg %p230
      %p457 = pneg %p227
      %p458 = pneg %p251
      %p459 = pneg %p248
      %p460 = pneg %p272
      %p461 = pneg %p269
      %p462 = pneg %p298
      %p463 = pneg %p295
      %s464 = smul.u32 16, %s25
      %p465 = scmp.lt.s32.totalorder %s464, 31
      %s466 = scalar_select %p465, %s464, 31
      %s467 = smul.addr %s466, 4
      %s468 = scalar_lea.vmem %s10, %s467
      %s469 = smul.u32 4, %s25
      %s470 = smul.u32 2, %s26
      %p471 = scmp.lt.s32.totalorder %s469, 7
      %s472 = scalar_select %p471, %s469, 7
      %p473 = scmp.lt.s32.totalorder %s470, 1
      %s474 = scalar_select %p473, %s470, 1
      %s475 = smul.addr %s472, 2
      %s476 = sadd.s32 %s474, %s475
      %s477 = smul.addr %s476, 8
      %s478 = scalar_lea.vmem %s0, %s477
      %s479 = smul.u32 4, %s25
      %s480 = smul.u32 2, %s26
      %s481 = smul.u32 4, %s25
      %s482 = smul.u32 2, %s26
      %p483 = scmp.lt.s32.totalorder %s481, 7
      %s484 = scalar_select %p483, %s481, 7
      %p485 = scmp.lt.s32.totalorder %s482, 1
      %s486 = scalar_select %p485, %s482, 1
      %s487 = smul.addr %s484, 2
      %s488 = sadd.s32 %s486, %s487
      %s489 = smul.addr %s488, 8
      %s490 = scalar_lea.vmem %s1, %s489
      %s491 = smul.u32 4, %s25
      %s492 = smul.u32 2, %s26
      %s493 = smul.u32 16, %s25
      %p494 = scmp.lt.s32.totalorder %s493, 31
      %s495 = scalar_select %p494, %s493, 31
      %s496 = smul.addr %s495, 8
      %s497 = scalar_lea.vmem %s2, %s496
      %s498 = smul.u32 16, %s25
      %s499 = smul.u32 16, %s25
      %p500 = scmp.lt.s32.totalorder %s499, 31
      %s501 = scalar_select %p500, %s499, 31
      %s502 = smul.addr %s501, 8
      %s503 = scalar_lea.vmem %s3, %s502
      %s504 = smul.u32 16, %s25
      %s505 = smul.u32 32, %s26
      %p506 = scmp.lt.s32.totalorder %s505, 31
      %s507 = scalar_select %p506, %s505, 31
      %s508 = smul.addr %s507, 4
      %s509 = scalar_lea.vmem %s4, %s508
      %s510 = smul.u32 32, %s26
      %s511 = smul.u32 16, %s25
      %p512 = scmp.lt.s32.totalorder %s511, 31
      %s513 = scalar_select %p512, %s511, 31
      %s514 = smul.addr %s513, 4
      %s515 = scalar_lea.vmem %s5, %s514
      %s516 = smul.u32 16, %s25
      %s517 = smul.u32 16, %s25
      %p518 = scmp.lt.s32.totalorder %s517, 31
      %s519 = scalar_select %p518, %s517, 31
      %s520 = smul.addr %s519, 4
      %s521 = scalar_lea.vmem %s10, %s520
      %s522 = smul.u32 16, %s25
      %p524 = scmp.eq.s32.totalorder %s26, 0
      // Predicated region
      $region61: #{tpu_custom_call.1} parent=59 // pred_check
        %p525 = pneg %p524
      $region62: #{tpu_custom_call.1} parent=59 // pred_check_branch
        %527 = sbr.rel (%p525) target = $region64
      $region63: #{tpu_custom_call.1} parent=59 // pred_region
        %vm528 = vcmask 130048
        %529 = vst.msk [vmem:[#allocation2] sm:$0xff] %vm528, 0.0
        %530 = vst.msk [vmem:[#allocation2 + $0x8] sm:$0xff] %vm528, 0.0
        %531 = vst.msk [vmem:[#allocation2 + $0x10] sm:$0xff] %vm528, 0.0
        %532 = vst.msk [vmem:[#allocation2 + $0x18] sm:$0xff] %vm528, 0.0
        %533 = vst.msk [vmem:[#allocation2 + $0x20] sm:$0xff] %vm528, 0.0
        %534 = vst.msk [vmem:[#allocation2 + $0x28] sm:$0xff] %vm528, 0.0
        %535 = vst.msk [vmem:[#allocation2 + $0x30] sm:$0xff] %vm528, 0.0
        %536 = vst.msk [vmem:[#allocation2 + $0x38] sm:$0xff] %vm528, 0.0
        %537 = vst.msk [vmem:[#allocation2 + $0x40] sm:$0xff] %vm528, 0.0
        %538 = vst.msk [vmem:[#allocation2 + $0x48] sm:$0xff] %vm528, 0.0
        %539 = vst.msk [vmem:[#allocation2 + $0x50] sm:$0xff] %vm528, 0.0
        %540 = vst.msk [vmem:[#allocation2 + $0x58] sm:$0xff] %vm528, 0.0
        %541 = vst.msk [vmem:[#allocation2 + $0x60] sm:$0xff] %vm528, 0.0
        %542 = vst.msk [vmem:[#allocation2 + $0x68] sm:$0xff] %vm528, 0.0
        %543 = vst.msk [vmem:[#allocation2 + $0x70] sm:$0xff] %vm528, 0.0
        %544 = vst.msk [vmem:[#allocation2 + $0x78] sm:$0xff] %vm528, 0.0
        %545 = vst.msk [vmem:[#allocation3] sm:$0xff] %vm528, 0.0
        %546 = vst.msk [vmem:[#allocation3 + $0x8] sm:$0xff] %vm528, 0.0
        %547 = vst.msk [vmem:[#allocation3 + $0x10] sm:$0xff] %vm528, 0.0
        %548 = vst.msk [vmem:[#allocation3 + $0x18] sm:$0xff] %vm528, 0.0
        %549 = vst.msk [vmem:[#allocation3 + $0x20] sm:$0xff] %vm528, 0.0
        %550 = vst.msk [vmem:[#allocation3 + $0x28] sm:$0xff] %vm528, 0.0
        %551 = vst.msk [vmem:[#allocation3 + $0x30] sm:$0xff] %vm528, 0.0
        %552 = vst.msk [vmem:[#allocation3 + $0x38] sm:$0xff] %vm528, 0.0
        %553 = vst.msk [vmem:[#allocation3 + $0x40] sm:$0xff] %vm528, 0.0
        %554 = vst.msk [vmem:[#allocation3 + $0x48] sm:$0xff] %vm528, 0.0
        %555 = vst.msk [vmem:[#allocation3 + $0x50] sm:$0xff] %vm528, 0.0
        %556 = vst.msk [vmem:[#allocation3 + $0x58] sm:$0xff] %vm528, 0.0
        %557 = vst.msk [vmem:[#allocation3 + $0x60] sm:$0xff] %vm528, 0.0
        %558 = vst.msk [vmem:[#allocation3 + $0x68] sm:$0xff] %vm528, 0.0
        %559 = vst.msk [vmem:[#allocation3 + $0x70] sm:$0xff] %vm528, 0.0
        %560 = vst.msk [vmem:[#allocation3 + $0x78] sm:$0xff] %vm528, 0.0
      $region64: #{tpu_custom_call.1} parent=59 // pred_fallthru
        _
      %v561 = vld [vmem:[%s509] sm:$0xf]
      %v562 = vld [vmem:[%s509 + $0x4] sm:$0xf]
      %v563 = vld [vmem:[%s509 + $0x8] sm:$0xf]
      %v564 = vld [vmem:[%s509 + $0xc] sm:$0xf]
      %v565 = vld [vmem:[%s509 + $0x10] sm:$0xf]
      %v566 = vld [vmem:[%s509 + $0x14] sm:$0xf]
      %v567 = vld [vmem:[%s509 + $0x18] sm:$0xf]
      %v568 = vld [vmem:[%s509 + $0x1c] sm:$0xf]
      %v569 = vld [vmem:[%s509 + $0x20] sm:$0xf]
      %v570 = vld [vmem:[%s509 + $0x24] sm:$0xf]
      %v571 = vld [vmem:[%s509 + $0x28] sm:$0xf]
      %v572 = vld [vmem:[%s509 + $0x2c] sm:$0xf]
      %v573 = vld [vmem:[%s509 + $0x30] sm:$0xf]
      %v574 = vld [vmem:[%s509 + $0x34] sm:$0xf]
      %v575 = vld [vmem:[%s509 + $0x38] sm:$0xf]
      %v576 = vld [vmem:[%s509 + $0x3c] sm:$0xf]
      %v577 = vld [vmem:[%s509 + $0x40] sm:$0xf]
      %v578 = vld [vmem:[%s509 + $0x44] sm:$0xf]
      %v579 = vld [vmem:[%s509 + $0x48] sm:$0xf]
      %v580 = vld [vmem:[%s509 + $0x4c] sm:$0xf]
      %v581 = vld [vmem:[%s509 + $0x50] sm:$0xf]
      %v582 = vld [vmem:[%s509 + $0x54] sm:$0xf]
      %v583 = vld [vmem:[%s509 + $0x58] sm:$0xf]
      %v584 = vld [vmem:[%s509 + $0x5c] sm:$0xf]
      %v585 = vld [vmem:[%s509 + $0x60] sm:$0xf]
      %v586 = vld [vmem:[%s509 + $0x64] sm:$0xf]
      %v587 = vld [vmem:[%s509 + $0x68] sm:$0xf]
      %v588 = vld [vmem:[%s509 + $0x6c] sm:$0xf]
      %v589 = vld [vmem:[%s509 + $0x70] sm:$0xf]
      %v590 = vld [vmem:[%s509 + $0x74] sm:$0xf]
      %v591 = vld [vmem:[%s509 + $0x78] sm:$0xf]
      %v592 = vld [vmem:[%s509 + $0x7c] sm:$0xf]
      %v593 = vld [vmem:[%s478] sm:$0xff]
      %v594 = vld [vmem:[%s478 + $0x8] sm:$0xff]
      %v595 = vld [vmem:[%s478 + $0x10] sm:$0xff]
      %v596 = vld [vmem:[%s478 + $0x18] sm:$0xff]
      %v597 = vld [vmem:[%s478 + $0x20] sm:$0xff]
      %v598 = vld [vmem:[%s478 + $0x28] sm:$0xff]
      %v599 = vld [vmem:[%s478 + $0x30] sm:$0xff]
      %v600 = vld [vmem:[%s478 + $0x38] sm:$0xff]
      %v601 = vunpack.c.l.s8.bf16 %v593
      %v602 = vunpack.c.l.s8.bf16 %v594
      %v603 = vunpack.c.h.s8.bf16 %v593
      %v604 = vunpack.c.h.s8.bf16 %v594
      %v605 = vunpack.c.l.s8.bf16 %v595
      %v606 = vunpack.c.l.s8.bf16 %v596
      %v607 = vunpack.c.h.s8.bf16 %v595
      %v608 = vunpack.c.h.s8.bf16 %v596
      %v609 = vunpack.c.l.s8.bf16 %v597
      %v610 = vunpack.c.l.s8.bf16 %v598
      %v611 = vunpack.c.h.s8.bf16 %v597
      %v612 = vunpack.c.h.s8.bf16 %v598
      %v613 = vunpack.c.l.s8.bf16 %v599
      %v614 = vunpack.c.l.s8.bf16 %v600
      %v615 = vunpack.c.h.s8.bf16 %v599
      %v616 = vunpack.c.h.s8.bf16 %v600
      %v617 = vld [vmem:[%s490] sm:$0xff]
      %v618 = vld [vmem:[%s490 + $0x8] sm:$0xff]
      %v619 = vld [vmem:[%s490 + $0x10] sm:$0xff]
      %v620 = vld [vmem:[%s490 + $0x18] sm:$0xff]
      %v621 = vld [vmem:[%s490 + $0x20] sm:$0xff]
      %v622 = vld [vmem:[%s490 + $0x28] sm:$0xff]
      %v623 = vld [vmem:[%s490 + $0x30] sm:$0xff]
      %v624 = vld [vmem:[%s490 + $0x38] sm:$0xff]
      %v625 = vunpack.c.l.s8.bf16 %v617
      %v626 = vunpack.c.l.s8.bf16 %v618
      %v627 = vunpack.c.h.s8.bf16 %v617
      %v628 = vunpack.c.h.s8.bf16 %v618
      %v629 = vunpack.c.l.s8.bf16 %v619
      %v630 = vunpack.c.l.s8.bf16 %v620
      %v631 = vunpack.c.h.s8.bf16 %v619
      %v632 = vunpack.c.h.s8.bf16 %v620
      %v633 = vunpack.c.l.s8.bf16 %v621
      %v634 = vunpack.c.l.s8.bf16 %v622
      %v635 = vunpack.c.h.s8.bf16 %v621
      %v636 = vunpack.c.h.s8.bf16 %v622
      %v637 = vunpack.c.l.s8.bf16 %v623
      %v638 = vunpack.c.l.s8.bf16 %v624
      %v639 = vunpack.c.h.s8.bf16 %v623
      %v640 = vunpack.c.h.s8.bf16 %v624
      %v641 = vld [vmem:[#allocation2] sm:$0xff]
      %v642 = vld [vmem:[#allocation2 + $0x8] sm:$0xff]
      %v643 = vld [vmem:[#allocation2 + $0x10] sm:$0xff]
      %v644 = vld [vmem:[#allocation2 + $0x18] sm:$0xff]
      %v645 = vld [vmem:[#allocation2 + $0x20] sm:$0xff]
      %v646 = vld [vmem:[#allocation2 + $0x28] sm:$0xff]
      %v647 = vld [vmem:[#allocation2 + $0x30] sm:$0xff]
      %v648 = vld [vmem:[#allocation2 + $0x38] sm:$0xff]
      %v649 = vld [vmem:[#allocation2 + $0x40] sm:$0xff]
      %v650 = vld [vmem:[#allocation2 + $0x48] sm:$0xff]
      %v651 = vld [vmem:[#allocation2 + $0x50] sm:$0xff]
      %v652 = vld [vmem:[#allocation2 + $0x58] sm:$0xff]
      %v653 = vld [vmem:[#allocation2 + $0x60] sm:$0xff]
      %v654 = vld [vmem:[#allocation2 + $0x68] sm:$0xff]
      %v655 = vld [vmem:[#allocation2 + $0x70] sm:$0xff]
      %v656 = vld [vmem:[#allocation2 + $0x78] sm:$0xff]
      %v689 = vunpack.c.l.b16 %v561
      %v690 = vunpack.c.l.b16 %v562
      %v691 = vunpack.c.l.b16 %v563
      %v692 = vunpack.c.l.b16 %v564
      %v693 = vunpack.c.l.b16 %v565
      %v694 = vunpack.c.l.b16 %v566
      %v695 = vunpack.c.l.b16 %v567
      %v696 = vunpack.c.l.b16 %v568
      %v697 = vunpack.c.l.b16 %v569
      %v698 = vunpack.c.l.b16 %v570
      %v699 = vunpack.c.l.b16 %v571
      %v700 = vunpack.c.l.b16 %v572
      %v701 = vunpack.c.l.b16 %v573
      %v702 = vunpack.c.l.b16 %v574
      %v703 = vunpack.c.l.b16 %v575
      %v704 = vunpack.c.l.b16 %v576
      %v705 = vunpack.c.l.b16 %v577
      %v706 = vunpack.c.l.b16 %v578
      %v707 = vunpack.c.l.b16 %v579
      %v708 = vunpack.c.l.b16 %v580
      %v709 = vunpack.c.l.b16 %v581
      %v710 = vunpack.c.l.b16 %v582
      %v711 = vunpack.c.l.b16 %v583
      %v712 = vunpack.c.l.b16 %v584
      %v713 = vunpack.c.l.b16 %v585
      %v714 = vunpack.c.l.b16 %v586
      %v715 = vunpack.c.l.b16 %v587
      %v716 = vunpack.c.l.b16 %v588
      %v717 = vunpack.c.l.b16 %v589
      %v718 = vunpack.c.l.b16 %v590
      %v719 = vunpack.c.l.b16 %v591
      %v720 = vunpack.c.l.b16 %v592
      %v721 = vpack.c.b16 %v690, %v689
      %v722 = vpack.c.b16 %v692, %v691
      %v723 = vpack.c.b16 %v694, %v693
      %v724 = vpack.c.b16 %v696, %v695
      %v725 = vpack.c.b16 %v698, %v697
      %v726 = vpack.c.b16 %v700, %v699
      %v727 = vpack.c.b16 %v702, %v701
      %v728 = vpack.c.b16 %v704, %v703
      %v729 = vpack.c.b16 %v706, %v705
      %v730 = vpack.c.b16 %v708, %v707
      %v731 = vpack.c.b16 %v710, %v709
      %v732 = vpack.c.b16 %v712, %v711
      %v733 = vpack.c.b16 %v714, %v713
      %v734 = vpack.c.b16 %v716, %v715
      %v735 = vpack.c.b16 %v718, %v717
      %v736 = vpack.c.b16 %v720, %v719
      %753 = vmatprep.subr.bf16.mxu0 0
      %754 = vmatpush1.bf16.msra.mxu0 %v721
      %755 = vmatprep.subr.bf16.mxu0 0
      %756 = vmatpush1.bf16.msra.mxu0 %v722
      %757 = vmatprep.subr.bf16.mxu0 0
      %758 = vmatpush1.bf16.msra.mxu0 %v723
      %759 = vmatprep.subr.bf16.mxu0 0
      %760 = vmatpush1.bf16.msra.mxu0 %v724
      %761 = vmatprep.subr.bf16.mxu0 0
      %762 = vmatpush1.bf16.msra.mxu0 %v725
      %763 = vmatprep.subr.bf16.mxu0 0
      %764 = vmatpush1.bf16.msra.mxu0 %v726
      %765 = vmatprep.subr.bf16.mxu0 0
      %766 = vmatpush1.bf16.msra.mxu0 %v727
      %767 = vmatprep.subr.bf16.mxu0 0
      %768 = vmatpush1.bf16.msra.mxu0 %v728
      %769 = vmatprep.subr.bf16.mxu0 0
      %770 = vmatpush1.bf16.msra.mxu0 %v729
      %771 = vmatprep.subr.bf16.mxu0 0
      %772 = vmatpush1.bf16.msra.mxu0 %v730
      %773 = vmatprep.subr.bf16.mxu0 0
      %774 = vmatpush1.bf16.msra.mxu0 %v731
      %775 = vmatprep.subr.bf16.mxu0 0
      %776 = vmatpush1.bf16.msra.mxu0 %v732
      %777 = vmatprep.subr.bf16.mxu0 0
      %778 = vmatpush1.bf16.msra.mxu0 %v733
      %779 = vmatprep.subr.bf16.mxu0 0
      %780 = vmatpush1.bf16.msra.mxu0 %v734
      %781 = vmatprep.subr.bf16.mxu0 0
      %782 = vmatpush1.bf16.msra.mxu0 %v735
      %783 = vmatprep.subr.bf16.mxu0 0
      %784 = vmatpush1.bf16.msra.mxu0 %v736
      %785 = vmatprep.mubr.bf16.mxu0 %v602
      %786 = vmatmul.mubr.bf16.gmra.mrb[0].mxu0 %v601
      %v787 = vpop.f32.mrb[0].mxu0
      %v788 = vadd.f32 0.0, %v787
      %v789 = vpop.f32.mrb[0].mxu0
      %v790 = vpop.f32.mrb[0].mxu0
      %v791 = vadd.f32 0.0, %v790
      %v792 = vpop.f32.mrb[0].mxu0
      %793 = vmatprep.mubr.bf16.mxu0 %v604
      %794 = vmatmul.mubr.bf16.gmra.mrb[0].mxu0 %v603
      %v795 = vpop.f32.mrb[0].mxu0
      %v796 = vadd.f32 0.0, %v795
      %v797 = vpop.f32.mrb[0].mxu0
      %v798 = vpop.f32.mrb[0].mxu0
      %v799 = vadd.f32 0.0, %v798
      %v800 = vpop.f32.mrb[0].mxu0
      %801 = vmatprep.mubr.bf16.mxu0 %v606
      %802 = vmatmul.mubr.bf16.gmra.mrb[0].mxu0 %v605
      %v803 = vpop.f32.mrb[0].mxu0
      %v804 = vadd.f32 0.0, %v803
      %v805 = vpop.f32.mrb[0].mxu0
      %v806 = vpop.f32.mrb[0].mxu0
      %v807 = vadd.f32 0.0, %v806
      %v808 = vpop.f32.mrb[0].mxu0
      %809 = vmatprep.mubr.bf16.mxu0 %v608
      %810 = vmatmul.mubr.bf16.gmra.mrb[0].mxu0 %v607
      %v811 = vpop.f32.mrb[0].mxu0
      %v812 = vadd.f32 0.0, %v811
      %v813 = vpop.f32.mrb[0].mxu0
      %v814 = vpop.f32.mrb[0].mxu0
      %v815 = vadd.f32 0.0, %v814
      %v816 = vpop.f32.mrb[0].mxu0
      %817 = vmatprep.mubr.bf16.mxu0 %v610
      %818 = vmatmul.mubr.bf16.gmra.mrb[0].mxu0 %v609
      %v819 = vpop.f32.mrb[0].mxu0
      %v820 = vadd.f32 0.0, %v819
      %v821 = vpop.f32.mrb[0].mxu0
      %v822 = vpop.f32.mrb[0].mxu0
      %v823 = vadd.f32 0.0, %v822
      %v824 = vpop.f32.mrb[0].mxu0
      %825 = vmatprep.mubr.bf16.mxu0 %v612
      %826 = vmatmul.mubr.bf16.gmra.mrb[0].mxu0 %v611
      %v827 = vpop.f32.mrb[0].mxu0
      %v828 = vadd.f32 0.0, %v827
      %v829 = vpop.f32.mrb[0].mxu0
      %v830 = vpop.f32.mrb[0].mxu0
      %v831 = vadd.f32 0.0, %v830
      %v832 = vpop.f32.mrb[0].mxu0
      %833 = vmatprep.mubr.bf16.mxu0 %v614
      %834 = vmatmul.mubr.bf16.gmra.mrb[0].mxu0 %v613
      %v835 = vpop.f32.mrb[0].mxu0
      %v836 = vadd.f32 0.0, %v835
      %v837 = vpop.f32.mrb[0].mxu0
      %v838 = vpop.f32.mrb[0].mxu0
      %v839 = vadd.f32 0.0, %v838
      %v840 = vpop.f32.mrb[0].mxu0
      %841 = vmatprep.mubr.bf16.mxu0 %v616
      %842 = vmatmul.mubr.bf16.gmra.mrb[0].mxu0 %v615
      %v843 = vpop.f32.mrb[0].mxu0
      %v844 = vadd.f32 0.0, %v843
      %v845 = vpop.f32.mrb[0].mxu0
      %v846 = vpop.f32.mrb[0].mxu0
      %v847 = vadd.f32 0.0, %v846
      %v848 = vpop.f32.mrb[0].mxu0
      %849 = vdwg.mxu0
      %v850 = vadd.f32 %v641, %v788
      %v851 = vadd.f32 %v642, %v791
      %v852 = vadd.f32 %v643, %v796
      %v853 = vadd.f32 %v644, %v799
      %v854 = vadd.f32 %v645, %v804
      %v855 = vadd.f32 %v646, %v807
      %v856 = vadd.f32 %v647, %v812
      %v857 = vadd.f32 %v648, %v815
      %v858 = vadd.f32 %v649, %v820
      %v859 = vadd.f32 %v650, %v823
      %v860 = vadd.f32 %v651, %v828
      %v861 = vadd.f32 %v652, %v831
      %v862 = vadd.f32 %v653, %v836
      %v863 = vadd.f32 %v654, %v839
      %v864 = vadd.f32 %v655, %v844
      %v865 = vadd.f32 %v656, %v847
      %vm866 = vcmask 130048
      %867 = vst.msk [vmem:[#allocation2] sm:$0xff] %vm866, %v850
      %868 = vst.msk [vmem:[#allocation2 + $0x8] sm:$0xff] %vm866, %v851
      %869 = vst.msk [vmem:[#allocation2 + $0x10] sm:$0xff] %vm866, %v852
      %870 = vst.msk [vmem:[#allocation2 + $0x18] sm:$0xff] %vm866, %v853
      %871 = vst.msk [vmem:[#allocation2 + $0x20] sm:$0xff] %vm866, %v854
      %872 = vst.msk [vmem:[#allocation2 + $0x28] sm:$0xff] %vm866, %v855
      %873 = vst.msk [vmem:[#allocation2 + $0x30] sm:$0xff] %vm866, %v856
      %874 = vst.msk [vmem:[#allocation2 + $0x38] sm:$0xff] %vm866, %v857
      %875 = vst.msk [vmem:[#allocation2 + $0x40] sm:$0xff] %vm866, %v858
      %876 = vst.msk [vmem:[#allocation2 + $0x48] sm:$0xff] %vm866, %v859
      %877 = vst.msk [vmem:[#allocation2 + $0x50] sm:$0xff] %vm866, %v860
      %878 = vst.msk [vmem:[#allocation2 + $0x58] sm:$0xff] %vm866, %v861
      %879 = vst.msk [vmem:[#allocation2 + $0x60] sm:$0xff] %vm866, %v862
      %880 = vst.msk [vmem:[#allocation2 + $0x68] sm:$0xff] %vm866, %v863
      %881 = vst.msk [vmem:[#allocation2 + $0x70] sm:$0xff] %vm866, %v864
      %882 = vst.msk [vmem:[#allocation2 + $0x78] sm:$0xff] %vm866, %v865
      %v883 = vld [vmem:[#allocation3] sm:$0xff]
      %v884 = vld [vmem:[#allocation3 + $0x8] sm:$0xff]
      %v885 = vld [vmem:[#allocation3 + $0x10] sm:$0xff]
      %v886 = vld [vmem:[#allocation3 + $0x18] sm:$0xff]
      %v887 = vld [vmem:[#allocation3 + $0x20] sm:$0xff]
      %v888 = vld [vmem:[#allocation3 + $0x28] sm:$0xff]
      %v889 = vld [vmem:[#allocation3 + $0x30] sm:$0xff]
      %v890 = vld [vmem:[#allocation3 + $0x38] sm:$0xff]
      %v891 = vld [vmem:[#allocation3 + $0x40] sm:$0xff]
      %v892 = vld [vmem:[#allocation3 + $0x48] sm:$0xff]
      %v893 = vld [vmem:[#allocation3 + $0x50] sm:$0xff]
      %v894 = vld [vmem:[#allocation3 + $0x58] sm:$0xff]
      %v895 = vld [vmem:[#allocation3 + $0x60] sm:$0xff]
      %v896 = vld [vmem:[#allocation3 + $0x68] sm:$0xff]
      %v897 = vld [vmem:[#allocation3 + $0x70] sm:$0xff]
      %v898 = vld [vmem:[#allocation3 + $0x78] sm:$0xff]
      %899 = vmatprep.subr.bf16.mxu0 0
      %900 = vmatpush1.bf16.msra.mxu0 %v721
      %901 = vmatprep.subr.bf16.mxu0 0
      %902 = vmatpush1.bf16.msra.mxu0 %v722
      %903 = vmatprep.subr.bf16.mxu0 0
      %904 = vmatpush1.bf16.msra.mxu0 %v723
      %905 = vmatprep.subr.bf16.mxu0 0
      %906 = vmatpush1.bf16.msra.mxu0 %v724
      %907 = vmatprep.subr.bf16.mxu0 0
      %908 = vmatpush1.bf16.msra.mxu0 %v725
      %909 = vmatprep.subr.bf16.mxu0 0
      %910 = vmatpush1.bf16.msra.mxu0 %v726
      %911 = vmatprep.subr.bf16.mxu0 0
      %912 = vmatpush1.bf16.msra.mxu0 %v727
      %913 = vmatprep.subr.bf16.mxu0 0
      %914 = vmatpush1.bf16.msra.mxu0 %v728
      %915 = vmatprep.subr.bf16.mxu0 0
      %916 = vmatpush1.bf16.msra.mxu0 %v729
      %917 = vmatprep.subr.bf16.mxu0 0
      %918 = vmatpush1.bf16.msra.mxu0 %v730
      %919 = vmatprep.subr.bf16.mxu0 0
      %920 = vmatpush1.bf16.msra.mxu0 %v731
      %921 = vmatprep.subr.bf16.mxu0 0
      %922 = vmatpush1.bf16.msra.mxu0 %v732
      %923 = vmatprep.subr.bf16.mxu0 0
      %924 = vmatpush1.bf16.msra.mxu0 %v733
      %925 = vmatprep.subr.bf16.mxu0 0
      %926 = vmatpush1.bf16.msra.mxu0 %v734
      %927 = vmatprep.subr.bf16.mxu0 0
      %928 = vmatpush1.bf16.msra.mxu0 %v735
      %929 = vmatprep.subr.bf16.mxu0 0
      %930 = vmatpush1.bf16.msra.mxu0 %v736
      %931 = vmatprep.mubr.bf16.mxu0 %v626
      %932 = vmatmul.mubr.bf16.gmra.mrb[0].mxu0 %v625
      %v933 = vpop.f32.mrb[0].mxu0
      %v934 = vadd.f32 0.0, %v933
      %v935 = vpop.f32.mrb[0].mxu0
      %v936 = vpop.f32.mrb[0].mxu0
      %v937 = vadd.f32 0.0, %v936
      %v938 = vpop.f32.mrb[0].mxu0
      %939 = vmatprep.mubr.bf16.mxu0 %v628
      %940 = vmatmul.mubr.bf16.gmra.mrb[0].mxu0 %v627
      %v941 = vpop.f32.mrb[0].mxu0
      %v942 = vadd.f32 0.0, %v941
      %v943 = vpop.f32.mrb[0].mxu0
      %v944 = vpop.f32.mrb[0].mxu0
      %v945 = vadd.f32 0.0, %v944
      %v946 = vpop.f32.mrb[0].mxu0
      %947 = vmatprep.mubr.bf16.mxu0 %v630
      %948 = vmatmul.mubr.bf16.gmra.mrb[0].mxu0 %v629
      %v949 = vpop.f32.mrb[0].mxu0
      %v950 = vadd.f32 0.0, %v949
      %v951 = vpop.f32.mrb[0].mxu0
      %v952 = vpop.f32.mrb[0].mxu0
      %v953 = vadd.f32 0.0, %v952
      %v954 = vpop.f32.mrb[0].mxu0
      %955 = vmatprep.mubr.bf16.mxu0 %v632
      %956 = vmatmul.mubr.bf16.gmra.mrb[0].mxu0 %v631
      %v957 = vpop.f32.mrb[0].mxu0
      %v958 = vadd.f32 0.0, %v957
      %v959 = vpop.f32.mrb[0].mxu0
      %v960 = vpop.f32.mrb[0].mxu0
      %v961 = vadd.f32 0.0, %v960
      %v962 = vpop.f32.mrb[0].mxu0
      %963 = vmatprep.mubr.bf16.mxu0 %v634
      %964 = vmatmul.mubr.bf16.gmra.mrb[0].mxu0 %v633
      %v965 = vpop.f32.mrb[0].mxu0
      %v966 = vadd.f32 0.0, %v965
      %v967 = vpop.f32.mrb[0].mxu0
      %v968 = vpop.f32.mrb[0].mxu0
      %v969 = vadd.f32 0.0, %v968
      %v970 = vpop.f32.mrb[0].mxu0
      %971 = vmatprep.mubr.bf16.mxu0 %v636
      %972 = vmatmul.mubr.bf16.gmra.mrb[0].mxu0 %v635
      %v973 = vpop.f32.mrb[0].mxu0
      %v974 = vadd.f32 0.0, %v973
      %v975 = vpop.f32.mrb[0].mxu0
      %v976 = vpop.f32.mrb[0].mxu0
      %v977 = vadd.f32 0.0, %v976
      %v978 = vpop.f32.mrb[0].mxu0
      %979 = vmatprep.mubr.bf16.mxu0 %v638
      %980 = vmatmul.mubr.bf16.gmra.mrb[0].mxu0 %v637
      %v981 = vpop.f32.mrb[0].mxu0
      %v982 = vadd.f32 0.0, %v981
      %v983 = vpop.f32.mrb[0].mxu0
      %v984 = vpop.f32.mrb[0].mxu0
      %v985 = vadd.f32 0.0, %v984
      %v986 = vpop.f32.mrb[0].mxu0
      %987 = vmatprep.mubr.bf16.mxu0 %v640
      %988 = vmatmul.mubr.bf16.gmra.mrb[0].mxu0 %v639
      %v989 = vpop.f32.mrb[0].mxu0
      %v990 = vadd.f32 0.0, %v989
      %v991 = vpop.f32.mrb[0].mxu0
      %v992 = vpop.f32.mrb[0].mxu0
      %v993 = vadd.f32 0.0, %v992
      %v994 = vpop.f32.mrb[0].mxu0
      %995 = vdwg.mxu0
      %v996 = vadd.f32 %v883, %v934
      %v997 = vadd.f32 %v884, %v937
      %v998 = vadd.f32 %v885, %v942
      %v999 = vadd.f32 %v886, %v945
      %v1000 = vadd.f32 %v887, %v950
      %v1001 = vadd.f32 %v888, %v953
      %v1002 = vadd.f32 %v889, %v958
      %v1003 = vadd.f32 %v890, %v961
      %v1004 = vadd.f32 %v891, %v966
      %v1005 = vadd.f32 %v892, %v969
      %v1006 = vadd.f32 %v893, %v974
      %v1007 = vadd.f32 %v894, %v977
      %v1008 = vadd.f32 %v895, %v982
      %v1009 = vadd.f32 %v896, %v985
      %v1010 = vadd.f32 %v897, %v990
      %v1011 = vadd.f32 %v898, %v993
      %1012 = vst.msk [vmem:[#allocation3] sm:$0xff] %vm866, %v996
      %1013 = vst.msk [vmem:[#allocation3 + $0x8] sm:$0xff] %vm866, %v997
      %1014 = vst.msk [vmem:[#allocation3 + $0x10] sm:$0xff] %vm866, %v998
      %1015 = vst.msk [vmem:[#allocation3 + $0x18] sm:$0xff] %vm866, %v999
      %1016 = vst.msk [vmem:[#allocation3 + $0x20] sm:$0xff] %vm866, %v1000
      %1017 = vst.msk [vmem:[#allocation3 + $0x28] sm:$0xff] %vm866, %v1001
      %1018 = vst.msk [vmem:[#allocation3 + $0x30] sm:$0xff] %vm866, %v1002
      %1019 = vst.msk [vmem:[#allocation3 + $0x38] sm:$0xff] %vm866, %v1003
      %1020 = vst.msk [vmem:[#allocation3 + $0x40] sm:$0xff] %vm866, %v1004
      %1021 = vst.msk [vmem:[#allocation3 + $0x48] sm:$0xff] %vm866, %v1005
      %1022 = vst.msk [vmem:[#allocation3 + $0x50] sm:$0xff] %vm866, %v1006
      %1023 = vst.msk [vmem:[#allocation3 + $0x58] sm:$0xff] %vm866, %v1007
      %1024 = vst.msk [vmem:[#allocation3 + $0x60] sm:$0xff] %vm866, %v1008
      %1025 = vst.msk [vmem:[#allocation3 + $0x68] sm:$0xff] %vm866, %v1009
      %1026 = vst.msk [vmem:[#allocation3 + $0x70] sm:$0xff] %vm866, %v1010
      %1027 = vst.msk [vmem:[#allocation3 + $0x78] sm:$0xff] %vm866, %v1011
      // Predicated region
      $region65: #{tpu_custom_call.1} parent=59 // pred_check
        %p1028 = pneg %p524
      $region66: #{tpu_custom_call.1} parent=59 // pred_check_branch
        %1030 = sbr.rel (%p1028) target = $region68
      $region67: #{tpu_custom_call.1} parent=59 // pred_region
        %v1031 = vld [vmem:[#allocation2] sm:$0xff]
        %v1032 = vld [vmem:[#allocation2 + $0x8] sm:$0xff]
        %v1033 = vld [vmem:[#allocation2 + $0x10] sm:$0xff]
        %v1034 = vld [vmem:[#allocation2 + $0x18] sm:$0xff]
        %v1035 = vld [vmem:[#allocation2 + $0x20] sm:$0xff]
        %v1036 = vld [vmem:[#allocation2 + $0x28] sm:$0xff]
        %v1037 = vld [vmem:[#allocation2 + $0x30] sm:$0xff]
        %v1038 = vld [vmem:[#allocation2 + $0x38] sm:$0xff]
        %v1039 = vld [vmem:[#allocation2 + $0x40] sm:$0xff]
        %v1040 = vld [vmem:[#allocation2 + $0x48] sm:$0xff]
        %v1041 = vld [vmem:[#allocation2 + $0x50] sm:$0xff]
        %v1042 = vld [vmem:[#allocation2 + $0x58] sm:$0xff]
        %v1043 = vld [vmem:[#allocation2 + $0x60] sm:$0xff]
        %v1044 = vld [vmem:[#allocation2 + $0x68] sm:$0xff]
        %v1045 = vld [vmem:[#allocation2 + $0x70] sm:$0xff]
        %v1046 = vld [vmem:[#allocation2 + $0x78] sm:$0xff]
        %v1047 = vld [vmem:[%s497] sm:$0xff]
        %v1048 = vld [vmem:[%s497 + $0x8] sm:$0xff]
        %v1049 = vld [vmem:[%s497 + $0x10] sm:$0xff]
        %v1050 = vld [vmem:[%s497 + $0x18] sm:$0xff]
        %v1051 = vld [vmem:[%s497 + $0x20] sm:$0xff]
        %v1052 = vld [vmem:[%s497 + $0x28] sm:$0xff]
        %v1053 = vld [vmem:[%s497 + $0x30] sm:$0xff]
        %v1054 = vld [vmem:[%s497 + $0x38] sm:$0xff]
        %v1055 = vld [vmem:[%s497 + $0x40] sm:$0xff]
        %v1056 = vld [vmem:[%s497 + $0x48] sm:$0xff]
        %v1057 = vld [vmem:[%s497 + $0x50] sm:$0xff]
        %v1058 = vld [vmem:[%s497 + $0x58] sm:$0xff]
        %v1059 = vld [vmem:[%s497 + $0x60] sm:$0xff]
        %v1060 = vld [vmem:[%s497 + $0x68] sm:$0xff]
        %v1061 = vld [vmem:[%s497 + $0x70] sm:$0xff]
        %v1062 = vld [vmem:[%s497 + $0x78] sm:$0xff]
        %1064 = vset.pattern.permute.xlu0 0
        %1065 = vperm.xlu0 %1064, %v1047
        %v1066 = vpop.permute.xlu0 %1065
        %1069 = vset.pattern.permute.xlu0 0
        %1070 = vperm.xlu0 %1069, %v1048
        %v1071 = vpop.permute.xlu0 %1070
        %1074 = vset.pattern.permute.xlu0 0
        %1075 = vperm.xlu0 %1074, %v1049
        %v1076 = vpop.permute.xlu0 %1075
        %1079 = vset.pattern.permute.xlu0 0
        %1080 = vperm.xlu0 %1079, %v1050
        %v1081 = vpop.permute.xlu0 %1080
        %1084 = vset.pattern.permute.xlu0 0
        %1085 = vperm.xlu0 %1084, %v1051
        %v1086 = vpop.permute.xlu0 %1085
        %1089 = vset.pattern.permute.xlu0 0
        %1090 = vperm.xlu0 %1089, %v1052
        %v1091 = vpop.permute.xlu0 %1090
        %1094 = vset.pattern.permute.xlu0 0
        %1095 = vperm.xlu0 %1094, %v1053
        %v1096 = vpop.permute.xlu0 %1095
        %1099 = vset.pattern.permute.xlu0 0
        %1100 = vperm.xlu0 %1099, %v1054
        %v1101 = vpop.permute.xlu0 %1100
        %1104 = vset.pattern.permute.xlu0 0
        %1105 = vperm.xlu0 %1104, %v1055
        %v1106 = vpop.permute.xlu0 %1105
        %1109 = vset.pattern.permute.xlu0 0
        %1110 = vperm.xlu0 %1109, %v1056
        %v1111 = vpop.permute.xlu0 %1110
        %1114 = vset.pattern.permute.xlu0 0
        %1115 = vperm.xlu0 %1114, %v1057
        %v1116 = vpop.permute.xlu0 %1115
        %1119 = vset.pattern.permute.xlu0 0
        %1120 = vperm.xlu0 %1119, %v1058
        %v1121 = vpop.permute.xlu0 %1120
        %1124 = vset.pattern.permute.xlu0 0
        %1125 = vperm.xlu0 %1124, %v1059
        %v1126 = vpop.permute.xlu0 %1125
        %1129 = vset.pattern.permute.xlu0 0
        %1130 = vperm.xlu0 %1129, %v1060
        %v1131 = vpop.permute.xlu0 %1130
        %1134 = vset.pattern.permute.xlu0 0
        %1135 = vperm.xlu0 %1134, %v1061
        %v1136 = vpop.permute.xlu0 %1135
        %1139 = vset.pattern.permute.xlu0 0
        %1140 = vperm.xlu0 %1139, %v1062
        %v1141 = vpop.permute.xlu0 %1140
        %v1143 = vmul.f32 %v1031, %v1066
        %v1144 = vmul.f32 %v1032, %v1071
        %v1145 = vmul.f32 %v1033, %v1076
        %v1146 = vmul.f32 %v1034, %v1081
        %v1147 = vmul.f32 %v1035, %v1086
        %v1148 = vmul.f32 %v1036, %v1091
        %v1149 = vmul.f32 %v1037, %v1096
        %v1150 = vmul.f32 %v1038, %v1101
        %v1151 = vmul.f32 %v1039, %v1106
        %v1152 = vmul.f32 %v1040, %v1111
        %v1153 = vmul.f32 %v1041, %v1116
        %v1154 = vmul.f32 %v1042, %v1121
        %v1155 = vmul.f32 %v1043, %v1126
        %v1156 = vmul.f32 %v1044, %v1131
        %v1157 = vmul.f32 %v1045, %v1136
        %v1158 = vmul.f32 %v1046, %v1141
        %v1159 = vpack.c.bf16 %v1144, %v1143
        %v1160 = vpack.c.bf16 %v1146, %v1145
        %v1161 = vpack.c.bf16 %v1148, %v1147
        %v1162 = vpack.c.bf16 %v1150, %v1149
        %v1163 = vpack.c.bf16 %v1152, %v1151
        %v1164 = vpack.c.bf16 %v1154, %v1153
        %v1165 = vpack.c.bf16 %v1156, %v1155
        %v1166 = vpack.c.bf16 %v1158, %v1157
        %v1167 = vld [vmem:[#allocation3] sm:$0xff]
        %v1168 = vld [vmem:[#allocation3 + $0x8] sm:$0xff]
        %v1169 = vld [vmem:[#allocation3 + $0x10] sm:$0xff]
        %v1170 = vld [vmem:[#allocation3 + $0x18] sm:$0xff]
        %v1171 = vld [vmem:[#allocation3 + $0x20] sm:$0xff]
        %v1172 = vld [vmem:[#allocation3 + $0x28] sm:$0xff]
        %v1173 = vld [vmem:[#allocation3 + $0x30] sm:$0xff]
        %v1174 = vld [vmem:[#allocation3 + $0x38] sm:$0xff]
        %v1175 = vld [vmem:[#allocation3 + $0x40] sm:$0xff]
        %v1176 = vld [vmem:[#allocation3 + $0x48] sm:$0xff]
        %v1177 = vld [vmem:[#allocation3 + $0x50] sm:$0xff]
        %v1178 = vld [vmem:[#allocation3 + $0x58] sm:$0xff]
        %v1179 = vld [vmem:[#allocation3 + $0x60] sm:$0xff]
        %v1180 = vld [vmem:[#allocation3 + $0x68] sm:$0xff]
        %v1181 = vld [vmem:[#allocation3 + $0x70] sm:$0xff]
        %v1182 = vld [vmem:[#allocation3 + $0x78] sm:$0xff]
        %v1183 = vld [vmem:[%s503] sm:$0xff]
        %v1184 = vld [vmem:[%s503 + $0x8] sm:$0xff]
        %v1185 = vld [vmem:[%s503 + $0x10] sm:$0xff]
        %v1186 = vld [vmem:[%s503 + $0x18] sm:$0xff]
        %v1187 = vld [vmem:[%s503 + $0x20] sm:$0xff]
        %v1188 = vld [vmem:[%s503 + $0x28] sm:$0xff]
        %v1189 = vld [vmem:[%s503 + $0x30] sm:$0xff]
        %v1190 = vld [vmem:[%s503 + $0x38] sm:$0xff]
        %v1191 = vld [vmem:[%s503 + $0x40] sm:$0xff]
        %v1192 = vld [vmem:[%s503 + $0x48] sm:$0xff]
        %v1193 = vld [vmem:[%s503 + $0x50] sm:$0xff]
        %v1194 = vld [vmem:[%s503 + $0x58] sm:$0xff]
        %v1195 = vld [vmem:[%s503 + $0x60] sm:$0xff]
        %v1196 = vld [vmem:[%s503 + $0x68] sm:$0xff]
        %v1197 = vld [vmem:[%s503 + $0x70] sm:$0xff]
        %v1198 = vld [vmem:[%s503 + $0x78] sm:$0xff]
        %1200 = vset.pattern.permute.xlu0 0
        %1201 = vperm.xlu0 %1200, %v1183
        %v1202 = vpop.permute.xlu0 %1201
        %1205 = vset.pattern.permute.xlu0 0
        %1206 = vperm.xlu0 %1205, %v1184
        %v1207 = vpop.permute.xlu0 %1206
        %1210 = vset.pattern.permute.xlu0 0
        %1211 = vperm.xlu0 %1210, %v1185
        %v1212 = vpop.permute.xlu0 %1211
        %1215 = vset.pattern.permute.xlu0 0
        %1216 = vperm.xlu0 %1215, %v1186
        %v1217 = vpop.permute.xlu0 %1216
        %1220 = vset.pattern.permute.xlu0 0
        %1221 = vperm.xlu0 %1220, %v1187
        %v1222 = vpop.permute.xlu0 %1221
        %1225 = vset.pattern.permute.xlu0 0
        %1226 = vperm.xlu0 %1225, %v1188
        %v1227 = vpop.permute.xlu0 %1226
        %1230 = vset.pattern.permute.xlu0 0
        %1231 = vperm.xlu0 %1230, %v1189
        %v1232 = vpop.permute.xlu0 %1231
        %1235 = vset.pattern.permute.xlu0 0
        %1236 = vperm.xlu0 %1235, %v1190
        %v1237 = vpop.permute.xlu0 %1236
        %1240 = vset.pattern.permute.xlu0 0
        %1241 = vperm.xlu0 %1240, %v1191
        %v1242 = vpop.permute.xlu0 %1241
        %1245 = vset.pattern.permute.xlu0 0
        %1246 = vperm.xlu0 %1245, %v1192
        %v1247 = vpop.permute.xlu0 %1246
        %1250 = vset.pattern.permute.xlu0 0
        %1251 = vperm.xlu0 %1250, %v1193
        %v1252 = vpop.permute.xlu0 %1251
        %1255 = vset.pattern.permute.xlu0 0
        %1256 = vperm.xlu0 %1255, %v1194
        %v1257 = vpop.permute.xlu0 %1256
        %1260 = vset.pattern.permute.xlu0 0
        %1261 = vperm.xlu0 %1260, %v1195
        %v1262 = vpop.permute.xlu0 %1261
        %1265 = vset.pattern.permute.xlu0 0
        %1266 = vperm.xlu0 %1265, %v1196
        %v1267 = vpop.permute.xlu0 %1266
        %1270 = vset.pattern.permute.xlu0 0
        %1271 = vperm.xlu0 %1270, %v1197
        %v1272 = vpop.permute.xlu0 %1271
        %1275 = vset.pattern.permute.xlu0 0
        %1276 = vperm.xlu0 %1275, %v1198
        %v1277 = vpop.permute.xlu0 %1276
        %v1279 = vmul.f32 %v1167, %v1202
        %v1280 = vmul.f32 %v1168, %v1207
        %v1281 = vmul.f32 %v1169, %v1212
        %v1282 = vmul.f32 %v1170, %v1217
        %v1283 = vmul.f32 %v1171, %v1222
        %v1284 = vmul.f32 %v1172, %v1227
        %v1285 = vmul.f32 %v1173, %v1232
        %v1286 = vmul.f32 %v1174, %v1237
        %v1287 = vmul.f32 %v1175, %v1242
        %v1288 = vmul.f32 %v1176, %v1247
        %v1289 = vmul.f32 %v1177, %v1252
        %v1290 = vmul.f32 %v1178, %v1257
        %v1291 = vmul.f32 %v1179, %v1262
        %v1292 = vmul.f32 %v1180, %v1267
        %v1293 = vmul.f32 %v1181, %v1272
        %v1294 = vmul.f32 %v1182, %v1277
        %v1295 = vpack.c.bf16 %v1280, %v1279
        %v1296 = vpack.c.bf16 %v1282, %v1281
        %v1297 = vpack.c.bf16 %v1284, %v1283
        %v1298 = vpack.c.bf16 %v1286, %v1285
        %v1299 = vpack.c.bf16 %v1288, %v1287
        %v1300 = vpack.c.bf16 %v1290, %v1289
        %v1301 = vpack.c.bf16 %v1292, %v1291
        %v1302 = vpack.c.bf16 %v1294, %v1293
        %v1303 = vld [vmem:[%s6] sm:$0xf]
        %v1304 = vld [vmem:[%s6 + $0x4] sm:$0xf]
        %v1305 = vld [vmem:[%s7] sm:$0xf]
        %v1306 = vld [vmem:[%s7 + $0x4] sm:$0xf]
        %v1309 = vunpack.c.l.b16 %v1305
        %v1310 = vunpack.c.l.b16 %v1306
        %v1311 = vpack.c.b16 %v1310, %v1309
        %v1314 = vsel %vm866, %v1295, 0
        %v1317 = vsel %vm866, %v1296, 0
        %v1320 = vsel %vm866, %v1297, 0
        %v1323 = vsel %vm866, %v1298, 0
        %v1326 = vsel %vm866, %v1299, 0
        %v1329 = vsel %vm866, %v1300, 0
        %v1332 = vsel %vm866, %v1301, 0
        %v1335 = vsel %vm866, %v1302, 0
        %1337 = vmatprep.subr.bf16.mxu0 0
        %1338 = vmatpush1.bf16.msra.mxu0 %v1311
        %1339 = vmatprep.subr.bf16.mxu0 0
        %1340 = vmatpush1.bf16.msra.mxu0 0
        %1341 = vmatprep.subr.bf16.mxu0 0
        %1342 = vmatpush1.bf16.msra.mxu0 0
        %1343 = vmatprep.subr.bf16.mxu0 0
        %1344 = vmatpush1.bf16.msra.mxu0 0
        %1345 = vmatprep.subr.bf16.mxu0 0
        %1346 = vmatpush1.bf16.msra.mxu0 0
        %1347 = vmatprep.subr.bf16.mxu0 0
        %1348 = vmatpush1.bf16.msra.mxu0 0
        %1349 = vmatprep.subr.bf16.mxu0 0
        %1350 = vmatpush1.bf16.msra.mxu0 0
        %1351 = vmatprep.subr.bf16.mxu0 0
        %1352 = vmatpush1.bf16.msra.mxu0 0
        %1353 = vmatprep.subr.bf16.mxu0 0
        %1354 = vmatpush1.bf16.msra.mxu0 0
        %1355 = vmatprep.subr.bf16.mxu0 0
        %1356 = vmatpush1.bf16.msra.mxu0 0
        %1357 = vmatprep.subr.bf16.mxu0 0
        %1358 = vmatpush1.bf16.msra.mxu0 0
        %1359 = vmatprep.subr.bf16.mxu0 0
        %1360 = vmatpush1.bf16.msra.mxu0 0
        %1361 = vmatprep.subr.bf16.mxu0 0
        %1362 = vmatpush1.bf16.msra.mxu0 0
        %1363 = vmatprep.subr.bf16.mxu0 0
        %1364 = vmatpush1.bf16.msra.mxu0 0
        %1365 = vmatprep.subr.bf16.mxu0 0
        %1366 = vmatpush1.bf16.msra.mxu0 0
        %1367 = vmatprep.subr.bf16.mxu0 0
        %1368 = vmatpush1.bf16.msra.mxu0 0
        %1369 = vmatprep.mubr.bf16.mxu0 0
        %1370 = vmatmul.mubr.bf16.gmra.mrb[0].mxu0 %v1314
        %v1371 = vpop.f32.mrb[0].mxu0
        %v1372 = vadd.f32 0.0, %v1371
        %v1373 = vpop.f32.mrb[0].mxu0
        %v1374 = vpop.f32.mrb[0].mxu0
        %v1375 = vadd.f32 0.0, %v1374
        %v1376 = vpop.f32.mrb[0].mxu0
        %1377 = vmatprep.mubr.bf16.mxu0 0
        %1378 = vmatmul.mubr.bf16.gmra.mrb[0].mxu0 %v1317
        %v1379 = vpop.f32.mrb[0].mxu0
        %v1380 = vadd.f32 0.0, %v1379
        %v1381 = vpop.f32.mrb[0].mxu0
        %v1382 = vpop.f32.mrb[0].mxu0
        %v1383 = vadd.f32 0.0, %v1382
        %v1384 = vpop.f32.mrb[0].mxu0
        %1385 = vmatprep.mubr.bf16.mxu0 0
        %1386 = vmatmul.mubr.bf16.gmra.mrb[0].mxu0 %v1320
        %v1387 = vpop.f32.mrb[0].mxu0
        %v1388 = vadd.f32 0.0, %v1387
        %v1389 = vpop.f32.mrb[0].mxu0
        %v1390 = vpop.f32.mrb[0].mxu0
        %v1391 = vadd.f32 0.0, %v1390
        %v1392 = vpop.f32.mrb[0].mxu0
        %1393 = vmatprep.mubr.bf16.mxu0 0
        %1394 = vmatmul.mubr.bf16.gmra.mrb[0].mxu0 %v1323
        %v1395 = vpop.f32.mrb[0].mxu0
        %v1396 = vadd.f32 0.0, %v1395
        %v1397 = vpop.f32.mrb[0].mxu0
        %v1398 = vpop.f32.mrb[0].mxu0
        %v1399 = vadd.f32 0.0, %v1398
        %v1400 = vpop.f32.mrb[0].mxu0
        %1401 = vmatprep.mubr.bf16.mxu0 0
        %1402 = vmatmul.mubr.bf16.gmra.mrb[0].mxu0 %v1326
        %v1403 = vpop.f32.mrb[0].mxu0
        %v1404 = vadd.f32 0.0, %v1403
        %v1405 = vpop.f32.mrb[0].mxu0
        %v1406 = vpop.f32.mrb[0].mxu0
        %v1407 = vadd.f32 0.0, %v1406
        %v1408 = vpop.f32.mrb[0].mxu0
        %1409 = vmatprep.mubr.bf16.mxu0 0
        %1410 = vmatmul.mubr.bf16.gmra.mrb[0].mxu0 %v1329
        %v1411 = vpop.f32.mrb[0].mxu0
        %v1412 = vadd.f32 0.0, %v1411
        %v1413 = vpop.f32.mrb[0].mxu0
        %v1414 = vpop.f32.mrb[0].mxu0
        %v1415 = vadd.f32 0.0, %v1414
        %v1416 = vpop.f32.mrb[0].mxu0
        %1417 = vmatprep.mubr.bf16.mxu0 0
        %1418 = vmatmul.mubr.bf16.gmra.mrb[0].mxu0 %v1332
        %v1419 = vpop.f32.mrb[0].mxu0
        %v1420 = vadd.f32 0.0, %v1419
        %v1421 = vpop.f32.mrb[0].mxu0
        %v1422 = vpop.f32.mrb[0].mxu0
        %v1423 = vadd.f32 0.0, %v1422
        %v1424 = vpop.f32.mrb[0].mxu0
        %1425 = vmatprep.mubr.bf16.mxu0 0
        %1426 = vmatmul.mubr.bf16.gmra.mrb[0].mxu0 %v1335
        %v1427 = vpop.f32.mrb[0].mxu0
        %v1428 = vadd.f32 0.0, %v1427
        %v1429 = vpop.f32.mrb[0].mxu0
        %v1430 = vpop.f32.mrb[0].mxu0
        %v1431 = vadd.f32 0.0, %v1430
        %v1432 = vpop.f32.mrb[0].mxu0
        %1433 = vdwg.mxu0
        %v1436 = vunpack.c.l.b16 %v1303
        %v1437 = vunpack.c.l.b16 %v1304
        %v1438 = vpack.c.b16 %v1437, %v1436
        %v1441 = vsel %vm866, %v1159, 0
        %v1444 = vsel %vm866, %v1160, 0
        %v1447 = vsel %vm866, %v1161, 0
        %v1450 = vsel %vm866, %v1162, 0
        %v1453 = vsel %vm866, %v1163, 0
        %v1456 = vsel %vm866, %v1164, 0
        %v1459 = vsel %vm866, %v1165, 0
        %v1462 = vsel %vm866, %v1166, 0
        %1464 = vmatprep.subr.bf16.mxu0 0
        %1465 = vmatpush1.bf16.msra.mxu0 %v1438
        %1466 = vmatprep.subr.bf16.mxu0 0
        %1467 = vmatpush1.bf16.msra.mxu0 0
        %1468 = vmatprep.subr.bf16.mxu0 0
        %1469 = vmatpush1.bf16.msra.mxu0 0
        %1470 = vmatprep.subr.bf16.mxu0 0
        %1471 = vmatpush1.bf16.msra.mxu0 0
        %1472 = vmatprep.subr.bf16.mxu0 0
        %1473 = vmatpush1.bf16.msra.mxu0 0
        %1474 = vmatprep.subr.bf16.mxu0 0
        %1475 = vmatpush1.bf16.msra.mxu0 0
        %1476 = vmatprep.subr.bf16.mxu0 0
        %1477 = vmatpush1.bf16.msra.mxu0 0
        %1478 = vmatprep.subr.bf16.mxu0 0
        %1479 = vmatpush1.bf16.msra.mxu0 0
        %1480 = vmatprep.subr.bf16.mxu0 0
        %1481 = vmatpush1.bf16.msra.mxu0 0
        %1482 = vmatprep.subr.bf16.mxu0 0
        %1483 = vmatpush1.bf16.msra.mxu0 0
        %1484 = vmatprep.subr.bf16.mxu0 0
        %1485 = vmatpush1.bf16.msra.mxu0 0
        %1486 = vmatprep.subr.bf16.mxu0 0
        %1487 = vmatpush1.bf16.msra.mxu0 0
        %1488 = vmatprep.subr.bf16.mxu0 0
        %1489 = vmatpush1.bf16.msra.mxu0 0
        %1490 = vmatprep.subr.bf16.mxu0 0
        %1491 = vmatpush1.bf16.msra.mxu0 0
        %1492 = vmatprep.subr.bf16.mxu0 0
        %1493 = vmatpush1.bf16.msra.mxu0 0
        %1494 = vmatprep.subr.bf16.mxu0 0
        %1495 = vmatpush1.bf16.msra.mxu0 0
        %1496 = vmatprep.mubr.bf16.mxu0 0
        %1497 = vmatmul.mubr.bf16.gmra.mrb[0].mxu0 %v1441
        %v1498 = vpop.f32.mrb[0].mxu0
        %v1499 = vadd.f32 %v1372, %v1498
        %v1500 = vpop.f32.mrb[0].mxu0
        %v1501 = vpop.f32.mrb[0].mxu0
        %v1502 = vadd.f32 %v1375, %v1501
        %v1503 = vpop.f32.mrb[0].mxu0
        %1504 = vmatprep.mubr.bf16.mxu0 0
        %1505 = vmatmul.mubr.bf16.gmra.mrb[0].mxu0 %v1444
        %v1506 = vpop.f32.mrb[0].mxu0
        %v1507 = vadd.f32 %v1380, %v1506
        %v1508 = vpop.f32.mrb[0].mxu0
        %v1509 = vpop.f32.mrb[0].mxu0
        %v1510 = vadd.f32 %v1383, %v1509
        %v1511 = vpop.f32.mrb[0].mxu0
        %1512 = vmatprep.mubr.bf16.mxu0 0
        %1513 = vmatmul.mubr.bf16.gmra.mrb[0].mxu0 %v1447
        %v1514 = vpop.f32.mrb[0].mxu0
        %v1515 = vadd.f32 %v1388, %v1514
        %v1516 = vpop.f32.mrb[0].mxu0
        %v1517 = vpop.f32.mrb[0].mxu0
        %v1518 = vadd.f32 %v1391, %v1517
        %v1519 = vpop.f32.mrb[0].mxu0
        %1520 = vmatprep.mubr.bf16.mxu0 0
        %1521 = vmatmul.mubr.bf16.gmra.mrb[0].mxu0 %v1450
        %v1522 = vpop.f32.mrb[0].mxu0
        %v1523 = vadd.f32 %v1396, %v1522
        %v1524 = vpop.f32.mrb[0].mxu0
        %v1525 = vpop.f32.mrb[0].mxu0
        %v1526 = vadd.f32 %v1399, %v1525
        %v1527 = vpop.f32.mrb[0].mxu0
        %1528 = vmatprep.mubr.bf16.mxu0 0
        %1529 = vmatmul.mubr.bf16.gmra.mrb[0].mxu0 %v1453
        %v1530 = vpop.f32.mrb[0].mxu0
        %v1531 = vadd.f32 %v1404, %v1530
        %v1532 = vpop.f32.mrb[0].mxu0
        %v1533 = vpop.f32.mrb[0].mxu0
        %v1534 = vadd.f32 %v1407, %v1533
        %v1535 = vpop.f32.mrb[0].mxu0
        %1536 = vmatprep.mubr.bf16.mxu0 0
        %1537 = vmatmul.mubr.bf16.gmra.mrb[0].mxu0 %v1456
        %v1538 = vpop.f32.mrb[0].mxu0
        %v1539 = vadd.f32 %v1412, %v1538
        %v1540 = vpop.f32.mrb[0].mxu0
        %v1541 = vpop.f32.mrb[0].mxu0
        %v1542 = vadd.f32 %v1415, %v1541
        %v1543 = vpop.f32.mrb[0].mxu0
        %1544 = vmatprep.mubr.bf16.mxu0 0
        %1545 = vmatmul.mubr.bf16.gmra.mrb[0].mxu0 %v1459
        %v1546 = vpop.f32.mrb[0].mxu0
        %v1547 = vadd.f32 %v1420, %v1546
        %v1548 = vpop.f32.mrb[0].mxu0
        %v1549 = vpop.f32.mrb[0].mxu0
        %v1550 = vadd.f32 %v1423, %v1549
        %v1551 = vpop.f32.mrb[0].mxu0
        %1552 = vmatprep.mubr.bf16.mxu0 0
        %1553 = vmatmul.mubr.bf16.gmra.mrb[0].mxu0 %v1462
        %v1554 = vpop.f32.mrb[0].mxu0
        %v1555 = vadd.f32 %v1428, %v1554
        %v1556 = vpop.f32.mrb[0].mxu0
        %v1557 = vpop.f32.mrb[0].mxu0
        %v1558 = vadd.f32 %v1431, %v1557
        %v1559 = vpop.f32.mrb[0].mxu0
        %1560 = vdwg.mxu0
        %v1561 = vld [vmem:[%s515] sm:$0xf]
        %v1562 = vld [vmem:[%s515 + $0x4] sm:$0xf]
        %v1563 = vld [vmem:[%s515 + $0x8] sm:$0xf]
        %v1564 = vld [vmem:[%s515 + $0xc] sm:$0xf]
        %v1565 = vld [vmem:[%s515 + $0x10] sm:$0xf]
        %v1566 = vld [vmem:[%s515 + $0x14] sm:$0xf]
        %v1567 = vld [vmem:[%s515 + $0x18] sm:$0xf]
        %v1568 = vld [vmem:[%s515 + $0x1c] sm:$0xf]
        %v1569 = vld [vmem:[%s515 + $0x20] sm:$0xf]
        %v1570 = vld [vmem:[%s515 + $0x24] sm:$0xf]
        %v1571 = vld [vmem:[%s515 + $0x28] sm:$0xf]
        %v1572 = vld [vmem:[%s515 + $0x2c] sm:$0xf]
        %v1573 = vld [vmem:[%s515 + $0x30] sm:$0xf]
        %v1574 = vld [vmem:[%s515 + $0x34] sm:$0xf]
        %v1575 = vld [vmem:[%s515 + $0x38] sm:$0xf]
        %v1576 = vld [vmem:[%s515 + $0x3c] sm:$0xf]
        %v1577 = vld [vmem:[%s8] sm:$0xf]
        %v1578 = vld [vmem:[%s8 + $0x4] sm:$0xf]
        %v1595 = vunpack.c.l.b16 %v1561
        %v1596 = vunpack.c.l.b16 %v1562
        %v1597 = vunpack.c.l.b16 %v1563
        %v1598 = vunpack.c.l.b16 %v1564
        %v1599 = vunpack.c.l.b16 %v1565
        %v1600 = vunpack.c.l.b16 %v1566
        %v1601 = vunpack.c.l.b16 %v1567
        %v1602 = vunpack.c.l.b16 %v1568
        %v1603 = vunpack.c.l.b16 %v1569
        %v1604 = vunpack.c.l.b16 %v1570
        %v1605 = vunpack.c.l.b16 %v1571
        %v1606 = vunpack.c.l.b16 %v1572
        %v1607 = vunpack.c.l.b16 %v1573
        %v1608 = vunpack.c.l.b16 %v1574
        %v1609 = vunpack.c.l.b16 %v1575
        %v1610 = vunpack.c.l.b16 %v1576
        %v1611 = vpack.c.b16 %v1596, %v1595
        %v1612 = vpack.c.b16 %v1598, %v1597
        %v1613 = vpack.c.b16 %v1600, %v1599
        %v1614 = vpack.c.b16 %v1602, %v1601
        %v1615 = vpack.c.b16 %v1604, %v1603
        %v1616 = vpack.c.b16 %v1606, %v1605
        %v1617 = vpack.c.b16 %v1608, %v1607
        %v1618 = vpack.c.b16 %v1610, %v1609
        %v1621 = vunpack.c.l.b16 %v1577
        %v1622 = vunpack.c.l.b16 %v1578
        %v1623 = vpack.c.b16 %v1622, %v1621
        %v1626 = vsel %vm866, %v1611, 0
        %v1629 = vsel %vm866, %v1612, 0
        %v1632 = vsel %vm866, %v1613, 0
        %v1635 = vsel %vm866, %v1614, 0
        %v1638 = vsel %vm866, %v1615, 0
        %v1641 = vsel %vm866, %v1616, 0
        %v1644 = vsel %vm866, %v1617, 0
        %v1647 = vsel %vm866, %v1618, 0
        %1649 = vmatprep.subr.bf16.mxu0 0
        %1650 = vmatpush1.bf16.msra.mxu0 %v1623
        %1651 = vmatprep.subr.bf16.mxu0 0
        %1652 = vmatpush1.bf16.msra.mxu0 0
        %1653 = vmatprep.subr.bf16.mxu0 0
        %1654 = vmatpush1.bf16.msra.mxu0 0
        %1655 = vmatprep.subr.bf16.mxu0 0
        %1656 = vmatpush1.bf16.msra.mxu0 0
        %1657 = vmatprep.subr.bf16.mxu0 0
        %1658 = vmatpush1.bf16.msra.mxu0 0
        %1659 = vmatprep.subr.bf16.mxu0 0
        %1660 = vmatpush1.bf16.msra.mxu0 0
        %1661 = vmatprep.subr.bf16.mxu0 0
        %1662 = vmatpush1.bf16.msra.mxu0 0
        %1663 = vmatprep.subr.bf16.mxu0 0
        %1664 = vmatpush1.bf16.msra.mxu0 0
        %1665 = vmatprep.subr.bf16.mxu0 0
        %1666 = vmatpush1.bf16.msra.mxu0 0
        %1667 = vmatprep.subr.bf16.mxu0 0
        %1668 = vmatpush1.bf16.msra.mxu0 0
        %1669 = vmatprep.subr.bf16.mxu0 0
        %1670 = vmatpush1.bf16.msra.mxu0 0
        %1671 = vmatprep.subr.bf16.mxu0 0
        %1672 = vmatpush1.bf16.msra.mxu0 0
        %1673 = vmatprep.subr.bf16.mxu0 0
        %1674 = vmatpush1.bf16.msra.mxu0 0
        %1675 = vmatprep.subr.bf16.mxu0 0
        %1676 = vmatpush1.bf16.msra.mxu0 0
        %1677 = vmatprep.subr.bf16.mxu0 0
        %1678 = vmatpush1.bf16.msra.mxu0 0
        %1679 = vmatprep.subr.bf16.mxu0 0
        %1680 = vmatpush1.bf16.msra.mxu0 0
        %1681 = vmatprep.mubr.bf16.mxu0 0
        %1682 = vmatmul.mubr.bf16.gmra.mrb[0].mxu0 %v1626
        %v1683 = vpop.f32.mrb[0].mxu0
        %v1684 = vadd.f32 0.0, %v1683
        %v1685 = vpop.f32.mrb[0].mxu0
        %v1686 = vpop.f32.mrb[0].mxu0
        %v1687 = vadd.f32 0.0, %v1686
        %v1688 = vpop.f32.mrb[0].mxu0
        %1689 = vmatprep.mubr.bf16.mxu0 0
        %1690 = vmatmul.mubr.bf16.gmra.mrb[0].mxu0 %v1629
        %v1691 = vpop.f32.mrb[0].mxu0
        %v1692 = vadd.f32 0.0, %v1691
        %v1693 = vpop.f32.mrb[0].mxu0
        %v1694 = vpop.f32.mrb[0].mxu0
        %v1695 = vadd.f32 0.0, %v1694
        %v1696 = vpop.f32.mrb[0].mxu0
        %1697 = vmatprep.mubr.bf16.mxu0 0
        %1698 = vmatmul.mubr.bf16.gmra.mrb[0].mxu0 %v1632
        %v1699 = vpop.f32.mrb[0].mxu0
        %v1700 = vadd.f32 0.0, %v1699
        %v1701 = vpop.f32.mrb[0].mxu0
        %v1702 = vpop.f32.mrb[0].mxu0
        %v1703 = vadd.f32 0.0, %v1702
        %v1704 = vpop.f32.mrb[0].mxu0
        %1705 = vmatprep.mubr.bf16.mxu0 0
        %1706 = vmatmul.mubr.bf16.gmra.mrb[0].mxu0 %v1635
        %v1707 = vpop.f32.mrb[0].mxu0
        %v1708 = vadd.f32 0.0, %v1707
        %v1709 = vpop.f32.mrb[0].mxu0
        %v1710 = vpop.f32.mrb[0].mxu0
        %v1711 = vadd.f32 0.0, %v1710
        %v1712 = vpop.f32.mrb[0].mxu0
        %1713 = vmatprep.mubr.bf16.mxu0 0
        %1714 = vmatmul.mubr.bf16.gmra.mrb[0].mxu0 %v1638
        %v1715 = vpop.f32.mrb[0].mxu0
        %v1716 = vadd.f32 0.0, %v1715
        %v1717 = vpop.f32.mrb[0].mxu0
        %v1718 = vpop.f32.mrb[0].mxu0
        %v1719 = vadd.f32 0.0, %v1718
        %v1720 = vpop.f32.mrb[0].mxu0
        %1721 = vmatprep.mubr.bf16.mxu0 0
        %1722 = vmatmul.mubr.bf16.gmra.mrb[0].mxu0 %v1641
        %v1723 = vpop.f32.mrb[0].mxu0
        %v1724 = vadd.f32 0.0, %v1723
        %v1725 = vpop.f32.mrb[0].mxu0
        %v1726 = vpop.f32.mrb[0].mxu0
        %v1727 = vadd.f32 0.0, %v1726
        %v1728 = vpop.f32.mrb[0].mxu0
        %1729 = vmatprep.mubr.bf16.mxu0 0
        %1730 = vmatmul.mubr.bf16.gmra.mrb[0].mxu0 %v1644
        %v1731 = vpop.f32.mrb[0].mxu0
        %v1732 = vadd.f32 0.0, %v1731
        %v1733 = vpop.f32.mrb[0].mxu0
        %v1734 = vpop.f32.mrb[0].mxu0
        %v1735 = vadd.f32 0.0, %v1734
        %v1736 = vpop.f32.mrb[0].mxu0
        %1737 = vmatprep.mubr.bf16.mxu0 0
        %1738 = vmatmul.mubr.bf16.gmra.mrb[0].mxu0 %v1647
        %v1739 = vpop.f32.mrb[0].mxu0
        %v1740 = vadd.f32 0.0, %v1739
        %v1741 = vpop.f32.mrb[0].mxu0
        %v1742 = vpop.f32.mrb[0].mxu0
        %v1743 = vadd.f32 0.0, %v1742
        %v1744 = vpop.f32.mrb[0].mxu0
        %1745 = vdwg.mxu0
        %v1746 = vadd.f32 %v1499, %v1684
        %v1747 = vadd.f32 %v1502, %v1687
        %v1748 = vadd.f32 %v1507, %v1692
        %v1749 = vadd.f32 %v1510, %v1695
        %v1750 = vadd.f32 %v1515, %v1700
        %v1751 = vadd.f32 %v1518, %v1703
        %v1752 = vadd.f32 %v1523, %v1708
        %v1753 = vadd.f32 %v1526, %v1711
        %v1754 = vadd.f32 %v1531, %v1716
        %v1755 = vadd.f32 %v1534, %v1719
        %v1756 = vadd.f32 %v1539, %v1724
        %v1757 = vadd.f32 %v1542, %v1727
        %v1758 = vadd.f32 %v1547, %v1732
        %v1759 = vadd.f32 %v1550, %v1735
        %v1760 = vadd.f32 %v1555, %v1740
        %v1761 = vadd.f32 %v1558, %v1743
        %v1762 = vld [vmem:[%s9] sm:$0x1]
        %v1764 = vlaneseq
        %v1765 = vshrl.u32 %v1764, 7
        %v1766 = vsub.s32 0, %v1765
        %v1767 = vrot.slane %v1762, %v1766
        %v1769 = vadd.f32 %v1746, %v1767
        %v1770 = vadd.f32 %v1747, %v1767
        %v1771 = vadd.f32 %v1748, %v1767
        %v1772 = vadd.f32 %v1749, %v1767
        %v1773 = vadd.f32 %v1750, %v1767
        %v1774 = vadd.f32 %v1751, %v1767
        %v1775 = vadd.f32 %v1752, %v1767
        %v1776 = vadd.f32 %v1753, %v1767
        %v1777 = vadd.f32 %v1754, %v1767
        %v1778 = vadd.f32 %v1755, %v1767
        %v1779 = vadd.f32 %v1756, %v1767
        %v1780 = vadd.f32 %v1757, %v1767
        %v1781 = vadd.f32 %v1758, %v1767
        %v1782 = vadd.f32 %v1759, %v1767
        %v1783 = vadd.f32 %v1760, %v1767
        %v1784 = vadd.f32 %v1761, %v1767
        %v1785 = vmul.f32 %v1769, %v1769
        %v1786 = vmul.f32 %v1770, %v1770
        %v1787 = vmul.f32 %v1771, %v1771
        %v1788 = vmul.f32 %v1772, %v1772
        %v1789 = vmul.f32 %v1773, %v1773
        %v1790 = vmul.f32 %v1774, %v1774
        %v1791 = vmul.f32 %v1775, %v1775
        %v1792 = vmul.f32 %v1776, %v1776
        %v1793 = vmul.f32 %v1777, %v1777
        %v1794 = vmul.f32 %v1778, %v1778
        %v1795 = vmul.f32 %v1779, %v1779
        %v1796 = vmul.f32 %v1780, %v1780
        %v1797 = vmul.f32 %v1781, %v1781
        %v1798 = vmul.f32 %v1782, %v1782
        %v1799 = vmul.f32 %v1783, %v1783
        %v1800 = vmul.f32 %v1784, %v1784
        %vm1801 = vcmask 261120
        %v1802 = vsel %vm1801, %v1785, 0.0
        %1803 = vadd.xlane.f32.xlu0 %v1802
        %v1804 = vpop.xlane.xlu0 %1803
        %v1805 = vsel %vm1801, %v1786, 0.0
        %1806 = vadd.xlane.f32.xlu0 %v1805
        %v1807 = vpop.xlane.xlu0 %1806
        %v1808 = vsel %vm1801, %v1787, 0.0
        %1809 = vadd.xlane.f32.xlu0 %v1808
        %v1810 = vpop.xlane.xlu0 %1809
        %v1811 = vsel %vm1801, %v1788, 0.0
        %1812 = vadd.xlane.f32.xlu0 %v1811
        %v1813 = vpop.xlane.xlu0 %1812
        %v1814 = vsel %vm1801, %v1789, 0.0
        %1815 = vadd.xlane.f32.xlu0 %v1814
        %v1816 = vpop.xlane.xlu0 %1815
        %v1817 = vsel %vm1801, %v1790, 0.0
        %1818 = vadd.xlane.f32.xlu0 %v1817
        %v1819 = vpop.xlane.xlu0 %1818
        %v1820 = vsel %vm1801, %v1791, 0.0
        %1821 = vadd.xlane.f32.xlu0 %v1820
        %v1822 = vpop.xlane.xlu0 %1821
        %v1823 = vsel %vm1801, %v1792, 0.0
        %1824 = vadd.xlane.f32.xlu0 %v1823
        %v1825 = vpop.xlane.xlu0 %1824
        %v1826 = vsel %vm1801, %v1793, 0.0
        %1827 = vadd.xlane.f32.xlu0 %v1826
        %v1828 = vpop.xlane.xlu0 %1827
        %v1829 = vsel %vm1801, %v1794, 0.0
        %1830 = vadd.xlane.f32.xlu0 %v1829
        %v1831 = vpop.xlane.xlu0 %1830
        %v1832 = vsel %vm1801, %v1795, 0.0
        %1833 = vadd.xlane.f32.xlu0 %v1832
        %v1834 = vpop.xlane.xlu0 %1833
        %v1835 = vsel %vm1801, %v1796, 0.0
        %1836 = vadd.xlane.f32.xlu0 %v1835
        %v1837 = vpop.xlane.xlu0 %1836
        %v1838 = vsel %vm1801, %v1797, 0.0
        %1839 = vadd.xlane.f32.xlu0 %v1838
        %v1840 = vpop.xlane.xlu0 %1839
        %v1841 = vsel %vm1801, %v1798, 0.0
        %1842 = vadd.xlane.f32.xlu0 %v1841
        %v1843 = vpop.xlane.xlu0 %1842
        %v1844 = vsel %vm1801, %v1799, 0.0
        %1845 = vadd.xlane.f32.xlu0 %v1844
        %v1846 = vpop.xlane.xlu0 %1845
        %v1847 = vsel %vm1801, %v1800, 0.0
        %1848 = vadd.xlane.f32.xlu0 %v1847
        %v1849 = vpop.xlane.xlu0 %1848
        %v1850 = vmax.f32 %v1804, 1e-24
        %v1851 = vmax.f32 %v1807, 1e-24
        %v1852 = vmax.f32 %v1810, 1e-24
        %v1853 = vmax.f32 %v1813, 1e-24
        %v1854 = vmax.f32 %v1816, 1e-24
        %v1855 = vmax.f32 %v1819, 1e-24
        %v1856 = vmax.f32 %v1822, 1e-24
        %v1857 = vmax.f32 %v1825, 1e-24
        %v1858 = vmax.f32 %v1828, 1e-24
        %v1859 = vmax.f32 %v1831, 1e-24
        %v1860 = vmax.f32 %v1834, 1e-24
        %v1861 = vmax.f32 %v1837, 1e-24
        %v1862 = vmax.f32 %v1840, 1e-24
        %v1863 = vmax.f32 %v1843, 1e-24
        %v1864 = vmax.f32 %v1846, 1e-24
        %v1865 = vmax.f32 %v1849, 1e-24
        %v1866 = vrsqrt.pop %v1850
        %v1867 = vrsqrt.pop %v1851
        %v1868 = vrsqrt.pop %v1852
        %v1869 = vrsqrt.pop %v1853
        %v1870 = vrsqrt.pop %v1854
        %v1871 = vrsqrt.pop %v1855
        %v1872 = vrsqrt.pop %v1856
        %v1873 = vrsqrt.pop %v1857
        %v1874 = vrsqrt.pop %v1858
        %v1875 = vrsqrt.pop %v1859
        %v1876 = vrsqrt.pop %v1860
        %v1877 = vrsqrt.pop %v1861
        %v1878 = vrsqrt.pop %v1862
        %v1879 = vrsqrt.pop %v1863
        %v1880 = vrsqrt.pop %v1864
        %v1881 = vrsqrt.pop %v1865
        %1898 = vrot.lane.b32.xlu0 %v1785, 96
        %v1899 = vpop.permute.xlu0 %1898
        %1900 = vrot.lane.b32.xlu0 %v1786, 96
        %v1901 = vpop.permute.xlu0 %1900
        %1902 = vrot.lane.b32.xlu0 %v1787, 96
        %v1903 = vpop.permute.xlu0 %1902
        %1904 = vrot.lane.b32.xlu0 %v1788, 96
        %v1905 = vpop.permute.xlu0 %1904
        %1906 = vrot.lane.b32.xlu0 %v1789, 96
        %v1907 = vpop.permute.xlu0 %1906
        %1908 = vrot.lane.b32.xlu0 %v1790, 96
        %v1909 = vpop.permute.xlu0 %1908
        %1910 = vrot.lane.b32.xlu0 %v1791, 96
        %v1911 = vpop.permute.xlu0 %1910
        %1912 = vrot.lane.b32.xlu0 %v1792, 96
        %v1913 = vpop.permute.xlu0 %1912
        %1914 = vrot.lane.b32.xlu0 %v1793, 96
        %v1915 = vpop.permute.xlu0 %1914
        %1916 = vrot.lane.b32.xlu0 %v1794, 96
        %v1917 = vpop.permute.xlu0 %1916
        %1918 = vrot.lane.b32.xlu0 %v1795, 96
        %v1919 = vpop.permute.xlu0 %1918
        %1920 = vrot.lane.b32.xlu0 %v1796, 96
        %v1921 = vpop.permute.xlu0 %1920
        %1922 = vrot.lane.b32.xlu0 %v1797, 96
        %v1923 = vpop.permute.xlu0 %1922
        %1924 = vrot.lane.b32.xlu0 %v1798, 96
        %v1925 = vpop.permute.xlu0 %1924
        %1926 = vrot.lane.b32.xlu0 %v1799, 96
        %v1927 = vpop.permute.xlu0 %1926
        %1928 = vrot.lane.b32.xlu0 %v1800, 96
        %v1929 = vpop.permute.xlu0 %1928
        %v1946 = vsel %vm1801, %v1899, 0.0
        %1947 = vadd.xlane.f32.xlu0 %v1946
        %v1948 = vpop.xlane.xlu0 %1947
        %v1949 = vsel %vm1801, %v1901, 0.0
        %1950 = vadd.xlane.f32.xlu0 %v1949
        %v1951 = vpop.xlane.xlu0 %1950
        %v1952 = vsel %vm1801, %v1903, 0.0
        %1953 = vadd.xlane.f32.xlu0 %v1952
        %v1954 = vpop.xlane.xlu0 %1953
        %v1955 = vsel %vm1801, %v1905, 0.0
        %1956 = vadd.xlane.f32.xlu0 %v1955
        %v1957 = vpop.xlane.xlu0 %1956
        %v1958 = vsel %vm1801, %v1907, 0.0
        %1959 = vadd.xlane.f32.xlu0 %v1958
        %v1960 = vpop.xlane.xlu0 %1959
        %v1961 = vsel %vm1801, %v1909, 0.0
        %1962 = vadd.xlane.f32.xlu0 %v1961
        %v1963 = vpop.xlane.xlu0 %1962
        %v1964 = vsel %vm1801, %v1911, 0.0
        %1965 = vadd.xlane.f32.xlu0 %v1964
        %v1966 = vpop.xlane.xlu0 %1965
        %v1967 = vsel %vm1801, %v1913, 0.0
        %1968 = vadd.xlane.f32.xlu0 %v1967
        %v1969 = vpop.xlane.xlu0 %1968
        %v1970 = vsel %vm1801, %v1915, 0.0
        %1971 = vadd.xlane.f32.xlu0 %v1970
        %v1972 = vpop.xlane.xlu0 %1971
        %v1973 = vsel %vm1801, %v1917, 0.0
        %1974 = vadd.xlane.f32.xlu0 %v1973
        %v1975 = vpop.xlane.xlu0 %1974
        %v1976 = vsel %vm1801, %v1919, 0.0
        %1977 = vadd.xlane.f32.xlu0 %v1976
        %v1978 = vpop.xlane.xlu0 %1977
        %v1979 = vsel %vm1801, %v1921, 0.0
        %1980 = vadd.xlane.f32.xlu0 %v1979
        %v1981 = vpop.xlane.xlu0 %1980
        %v1982 = vsel %vm1801, %v1923, 0.0
        %1983 = vadd.xlane.f32.xlu0 %v1982
        %v1984 = vpop.xlane.xlu0 %1983
        %v1985 = vsel %vm1801, %v1925, 0.0
        %1986 = vadd.xlane.f32.xlu0 %v1985
        %v1987 = vpop.xlane.xlu0 %1986
        %v1988 = vsel %vm1801, %v1927, 0.0
        %1989 = vadd.xlane.f32.xlu0 %v1988
        %v1990 = vpop.xlane.xlu0 %1989
        %v1991 = vsel %vm1801, %v1929, 0.0
        %1992 = vadd.xlane.f32.xlu0 %v1991
        %v1993 = vpop.xlane.xlu0 %1992
        %v1994 = vmax.f32 %v1948, 1e-24
        %v1995 = vmax.f32 %v1951, 1e-24
        %v1996 = vmax.f32 %v1954, 1e-24
        %v1997 = vmax.f32 %v1957, 1e-24
        %v1998 = vmax.f32 %v1960, 1e-24
        %v1999 = vmax.f32 %v1963, 1e-24
        %v2000 = vmax.f32 %v1966, 1e-24
        %v2001 = vmax.f32 %v1969, 1e-24
        %v2002 = vmax.f32 %v1972, 1e-24
        %v2003 = vmax.f32 %v1975, 1e-24
        %v2004 = vmax.f32 %v1978, 1e-24
        %v2005 = vmax.f32 %v1981, 1e-24
        %v2006 = vmax.f32 %v1984, 1e-24
        %v2007 = vmax.f32 %v1987, 1e-24
        %v2008 = vmax.f32 %v1990, 1e-24
        %v2009 = vmax.f32 %v1993, 1e-24
        %v2010 = vrsqrt.pop %v1994
        %v2011 = vrsqrt.pop %v1995
        %v2012 = vrsqrt.pop %v1996
        %v2013 = vrsqrt.pop %v1997
        %v2014 = vrsqrt.pop %v1998
        %v2015 = vrsqrt.pop %v1999
        %v2016 = vrsqrt.pop %v2000
        %v2017 = vrsqrt.pop %v2001
        %v2018 = vrsqrt.pop %v2002
        %v2019 = vrsqrt.pop %v2003
        %v2020 = vrsqrt.pop %v2004
        %v2021 = vrsqrt.pop %v2005
        %v2022 = vrsqrt.pop %v2006
        %v2023 = vrsqrt.pop %v2007
        %v2024 = vrsqrt.pop %v2008
        %v2025 = vrsqrt.pop %v2009
        %v2026 = vmul.f32 %v1769, %v1866
        %v2027 = vmul.f32 %v1770, %v1867
        %v2028 = vmul.f32 %v1771, %v1868
        %v2029 = vmul.f32 %v1772, %v1869
        %v2030 = vmul.f32 %v1773, %v1870
        %v2031 = vmul.f32 %v1774, %v1871
        %v2032 = vmul.f32 %v1775, %v1872
        %v2033 = vmul.f32 %v1776, %v1873
        %v2034 = vmul.f32 %v1777, %v1874
        %v2035 = vmul.f32 %v1778, %v1875
        %v2036 = vmul.f32 %v1779, %v1876
        %v2037 = vmul.f32 %v1780, %v1877
        %v2038 = vmul.f32 %v1781, %v1878
        %v2039 = vmul.f32 %v1782, %v1879
        %v2040 = vmul.f32 %v1783, %v1880
        %v2041 = vmul.f32 %v1784, %v1881
        %v2042 = vmul.f32 %v1769, %v2010
        %v2043 = vmul.f32 %v1770, %v2011
        %v2044 = vmul.f32 %v1771, %v2012
        %v2045 = vmul.f32 %v1772, %v2013
        %v2046 = vmul.f32 %v1773, %v2014
        %v2047 = vmul.f32 %v1774, %v2015
        %v2048 = vmul.f32 %v1775, %v2016
        %v2049 = vmul.f32 %v1776, %v2017
        %v2050 = vmul.f32 %v1777, %v2018
        %v2051 = vmul.f32 %v1778, %v2019
        %v2052 = vmul.f32 %v1779, %v2020
        %v2053 = vmul.f32 %v1780, %v2021
        %v2054 = vmul.f32 %v1781, %v2022
        %v2055 = vmul.f32 %v1782, %v2023
        %v2056 = vmul.f32 %v1783, %v2024
        %v2057 = vmul.f32 %v1784, %v2025
        %v2058 = vsel %vm1801, %v2026, %v2042
        %v2059 = vsel %vm1801, %v2027, %v2043
        %v2060 = vsel %vm1801, %v2028, %v2044
        %v2061 = vsel %vm1801, %v2029, %v2045
        %v2062 = vsel %vm1801, %v2030, %v2046
        %v2063 = vsel %vm1801, %v2031, %v2047
        %v2064 = vsel %vm1801, %v2032, %v2048
        %v2065 = vsel %vm1801, %v2033, %v2049
        %v2066 = vsel %vm1801, %v2034, %v2050
        %v2067 = vsel %vm1801, %v2035, %v2051
        %v2068 = vsel %vm1801, %v2036, %v2052
        %v2069 = vsel %vm1801, %v2037, %v2053
        %v2070 = vsel %vm1801, %v2038, %v2054
        %v2071 = vsel %vm1801, %v2039, %v2055
        %v2072 = vsel %vm1801, %v2040, %v2056
        %v2073 = vsel %vm1801, %v2041, %v2057
        %v2074 = vtanh.pop %v2058
        %v2075 = vtanh.pop %v2059
        %v2076 = vtanh.pop %v2060
        %v2077 = vtanh.pop %v2061
        %v2078 = vtanh.pop %v2062
        %v2079 = vtanh.pop %v2063
        %v2080 = vtanh.pop %v2064
        %v2081 = vtanh.pop %v2065
        %v2082 = vtanh.pop %v2066
        %v2083 = vtanh.pop %v2067
        %v2084 = vtanh.pop %v2068
        %v2085 = vtanh.pop %v2069
        %v2086 = vtanh.pop %v2070
        %v2087 = vtanh.pop %v2071
        %v2088 = vtanh.pop %v2072
        %v2089 = vtanh.pop %v2073
        %v2090 = vpack.c.bf16 %v2075, %v2074
        %v2091 = vpack.c.bf16 %v2077, %v2076
        %v2092 = vpack.c.bf16 %v2079, %v2078
        %v2093 = vpack.c.bf16 %v2081, %v2080
        %v2094 = vpack.c.bf16 %v2083, %v2082
        %v2095 = vpack.c.bf16 %v2085, %v2084
        %v2096 = vpack.c.bf16 %v2087, %v2086
        %v2097 = vpack.c.bf16 %v2089, %v2088
        %v2106 = vunpack.c.l.b16 %v2090
        %v2107 = vunpack.c.h.b16 %v2090
        %v2108 = vunpack.c.l.b16 %v2091
        %v2109 = vunpack.c.h.b16 %v2091
        %v2110 = vunpack.c.l.b16 %v2092
        %v2111 = vunpack.c.h.b16 %v2092
        %v2112 = vunpack.c.l.b16 %v2093
        %v2113 = vunpack.c.h.b16 %v2093
        %v2114 = vunpack.c.l.b16 %v2094
        %v2115 = vunpack.c.h.b16 %v2094
        %v2116 = vunpack.c.l.b16 %v2095
        %v2117 = vunpack.c.h.b16 %v2095
        %v2118 = vunpack.c.l.b16 %v2096
        %v2119 = vunpack.c.h.b16 %v2096
        %v2120 = vunpack.c.l.b16 %v2097
        %v2121 = vunpack.c.h.b16 %v2097
        %v2122 = vpack.c.b16 %v2106, %v2106
        %v2123 = vpack.c.b16 %v2107, %v2107
        %v2124 = vpack.c.b16 %v2108, %v2108
        %v2125 = vpack.c.b16 %v2109, %v2109
        %v2126 = vpack.c.b16 %v2110, %v2110
        %v2127 = vpack.c.b16 %v2111, %v2111
        %v2128 = vpack.c.b16 %v2112, %v2112
        %v2129 = vpack.c.b16 %v2113, %v2113
        %v2130 = vpack.c.b16 %v2114, %v2114
        %v2131 = vpack.c.b16 %v2115, %v2115
        %v2132 = vpack.c.b16 %v2116, %v2116
        %v2133 = vpack.c.b16 %v2117, %v2117
        %v2134 = vpack.c.b16 %v2118, %v2118
        %v2135 = vpack.c.b16 %v2119, %v2119
        %v2136 = vpack.c.b16 %v2120, %v2120
        %v2137 = vpack.c.b16 %v2121, %v2121
        %vm2154 = vcmask 519168
        %2155 = vst.msk [vmem:[%s521] sm:$0xf] %vm2154, %v2122
        %2156 = vst.msk [vmem:[%s521 + $0x4] sm:$0xf] %vm2154, %v2123
        %2157 = vst.msk [vmem:[%s521 + $0x8] sm:$0xf] %vm2154, %v2124
        %2158 = vst.msk [vmem:[%s521 + $0xc] sm:$0xf] %vm2154, %v2125
        %2159 = vst.msk [vmem:[%s521 + $0x10] sm:$0xf] %vm2154, %v2126
        %2160 = vst.msk [vmem:[%s521 + $0x14] sm:$0xf] %vm2154, %v2127
        %2161 = vst.msk [vmem:[%s521 + $0x18] sm:$0xf] %vm2154, %v2128
        %2162 = vst.msk [vmem:[%s521 + $0x1c] sm:$0xf] %vm2154, %v2129
        %2163 = vst.msk [vmem:[%s521 + $0x20] sm:$0xf] %vm2154, %v2130
        %2164 = vst.msk [vmem:[%s521 + $0x24] sm:$0xf] %vm2154, %v2131
        %2165 = vst.msk [vmem:[%s521 + $0x28] sm:$0xf] %vm2154, %v2132
        %2166 = vst.msk [vmem:[%s521 + $0x2c] sm:$0xf] %vm2154, %v2133
        %2167 = vst.msk [vmem:[%s521 + $0x30] sm:$0xf] %vm2154, %v2134
        %2168 = vst.msk [vmem:[%s521 + $0x34] sm:$0xf] %vm2154, %v2135
        %2169 = vst.msk [vmem:[%s521 + $0x38] sm:$0xf] %vm2154, %v2136
        %2170 = vst.msk [vmem:[%s521 + $0x3c] sm:$0xf] %vm2154, %v2137
      $region68: #{tpu_custom_call.1} parent=59 // pred_fallthru
        _
      %s2171 = smul.u32 16, %s25
      %p2172 = scmp.lt.s32.totalorder %s2171, 31
      %s2173 = scalar_select %p2172, %s2171, 31
      %s2174 = smul.addr %s2173, 4
      %s2175 = scalar_lea.vmem %s10, %s2174
      // Predicated region
      $region69: #{tpu_custom_call.1} parent=59 // pred_check
        %p2176 = pneg %p295
      $region70: #{tpu_custom_call.1} parent=59 // pred_check_branch
        %2178 = sbr.rel (%p2176) target = $region72
      $region71: #{tpu_custom_call.1} parent=59 // pred_region
        %s2179 = smul.u32 16, %s25
      $region72: #{tpu_custom_call.1} parent=59 // pred_fallthru
        _
    $region60: #{tpu_custom_call.1} parent=5 // pred_fallthru
      _
    %p2180 = scmp.le.s32.totalorder 2, %s16
    // Predicated region
    $region73: #{tpu_custom_call.1} parent=5 // pred_check
      %p2181 = pneg %p2180
    $region74: #{tpu_custom_call.1} parent=5 // pred_check_branch
      %2183 = sbr.rel (%p2181) target = $region76
    $region75: #{tpu_custom_call.1} parent=5 // pred_region
      %s2184 = ssub.s32 %s16, 2
      // Predicated region
      $region77: #{tpu_custom_call.1} parent=75 // pred_check
        %p2185 = pneg %p301
      $region78: #{tpu_custom_call.1} parent=75 // pred_check_branch
        %2187 = sbr.rel (%p2185) target = $region80
      $region79: #{tpu_custom_call.1} parent=75 // pred_region
        %s2188 = smul.u32 16, %s27
        %p2189 = scmp.lt.s32.totalorder %s2188, 31
        %s2190 = scalar_select %p2189, %s2188, 31
        %s2191 = smul.addr %s2190, 4
        %s2192 = scalar_lea.vmem %s10, %s2191
      $region80: #{tpu_custom_call.1} parent=75 // pred_fallthru
        _
    $region76: #{tpu_custom_call.1} parent=5 // pred_fallthru
      _
  $region6: #{tpu_custom_call.1} parent=0 // loop_footer
    %s20 = sadd.s32 1, %s16
  $region7: #{tpu_custom_call.1} parent=0 // loop_footer_branch
    %15 = sbr.rel target = $region3
  $region8: #{tpu_custom_call.1} parent=0 // loop_exit
    _

</llo_original>
